<compile_context>
chip_gen: v7x
topology: tpu7x:2x2x1
jax: 0.10.0
libtpu: 0.0.40
codegen_flags: <defaults>
</compile_context>

<pallas_src>
import numpy as np
import jax
import jax.numpy as jnp
from jax import lax
from jax.experimental import pallas as pl
from jax.experimental.pallas import tpu as pltpu


# --------------------------------------------------------------------------- #
# Fused QKV 1x1 conv (theta / phi / g) -- channel major, bf16 outputs
# --------------------------------------------------------------------------- #
def qkv_proj(x, w_qkv, b_qkv, c_th, c_ph, c_g):
    """x: (B, C, HW) f32, w_qkv: (c_th+c_ph+c_g, C), b_qkv: (Ctot, 1)
    -> theta (B, c_th, HW), phi (B, c_ph, HW), g (B, c_g, HW), all bf16."""
    B, C, HW = x.shape
    Ctot = c_th + c_ph + c_g

    def kernel(x_ref, w_ref, b_ref, th_ref, ph_ref, g_ref):
        # (Ctot, C) @ (C, HW) + (Ctot, 1) -> (Ctot, HW), lane-dense output
        y = jnp.dot(w_ref[...], x_ref[...], preferred_element_type=jnp.float32)
        y = y + b_ref[...]
        th_ref[...] = y[:c_th, :].astype(th_ref.dtype)
        ph_ref[...] = y[c_th:c_th + c_ph, :].astype(ph_ref.dtype)
        g_ref[...] = y[c_th + c_ph:, :].astype(g_ref.dtype)

    return pl.pallas_call(
        kernel,
        out_shape=(
            jax.ShapeDtypeStruct((B, c_th, HW), jnp.bfloat16),
            jax.ShapeDtypeStruct((B, c_ph, HW), jnp.bfloat16),
            jax.ShapeDtypeStruct((B, c_g, HW), jnp.bfloat16),
        ),
        grid=(B,),
        in_specs=[
            pl.BlockSpec((None, C, HW), lambda b: (b, 0, 0)),
            pl.BlockSpec((Ctot, C), lambda b: (0, 0)),
            pl.BlockSpec((Ctot, 1), lambda b: (0, 0)),
        ],
        out_specs=(
            pl.BlockSpec((None, c_th, HW), lambda b: (b, 0, 0)),
            pl.BlockSpec((None, c_ph, HW), lambda b: (b, 0, 0)),
            pl.BlockSpec((None, c_g, HW), lambda b: (b, 0, 0)),
        ),
        compiler_params=pltpu.CompilerParams(
            dimension_semantics=("parallel",)),
    )(x, w_qkv, b_qkv)


# --------------------------------------------------------------------------- #
# Fused masked multi-head attention + output 1x1 conv + sigma residual
# --------------------------------------------------------------------------- #
def _make_attn_kernel(K, L):
    ratio = K // L
    if ratio > 0 and (ratio & (ratio - 1)) == 0:
        shift = int(ratio).bit_length() - 1
        proj_of = lambda k_idx: jnp.right_shift(k_idx, shift)
    else:
        proj_of = lambda k_idx: k_idx // ratio

    def kernel(theta_ref, phi_ref, g_ref, x_ref, w_ref, battn_ref, sigma_ref,
               out_ref, attn_ref):
        # theta_ref (J, K) bf16, phi_ref (J, L) bf16, g_ref (Jg, L) bf16
        # x_ref (C, HW) f32, w_ref (C, Jg) f32 (per-head slice of w_attn)
        i = pl.program_id(1)
        nh = pl.num_programs(1)

        @pl.when(i == 0)
        def _init():
            out_ref[...] = jnp.zeros_like(out_ref)

        # scores[k, l] = sum_j theta[j, k] * phi[j, l]   ('bijk,bijl->bikl' per (b, i))
        scores = lax.dot_general(
            theta_ref[...], phi_ref[...], (((0,), (0,)), ((), ())),
            preferred_element_type=jnp.float32)                    # (K, L) f32

        # --- additive mask bias generated in-kernel (never read from HBM) ---------
        # TODO(synk): stand-in for the YLG sparse.* floor/repetitive grid masks.
        k_idx = lax.broadcasted_iota(jnp.int32, (K, L), 0)
        l_idx = lax.broadcasted_iota(jnp.int32, (K, L), 1)
        proj = proj_of(k_idx)
        r = i % 2
        keep_rtl = (l_idx <= proj + r).astype(jnp.float32)
        keep_ltr = (l_idx >= proj - r).astype(jnp.float32)
        is_rtl = (i < 4).astype(jnp.float32)
        keep = is_rtl * keep_rtl + (1.0 - is_rtl) * keep_ltr       # {0,1} mask
        scores = scores + (keep - 1.0) * 1000.0                    # (1-mask) * -1000

        # --- softmax over L (f32 math, bf16 store) --------------------------------
        m = jnp.max(scores, axis=-1, keepdims=True)
        e = jnp.exp(scores - m)
        s = jnp.sum(e, axis=-1, keepdims=True)
        a = e * pl.reciprocal(s, approx=True)                      # EUP reciprocal
        a_bf = a.astype(attn_ref.dtype)
        attn_ref[...] = a_bf

        # attn_g[j, k] = sum_l g[j, l] * attn[k, l]      ('bijk,bilk->bijl' per (b, i))
        attng = lax.dot_general(
            g_ref[...], a_bf, (((1,), (1,)), ((), ())),
            preferred_element_type=jnp.float32)                    # (Jg, K) f32

        # This head's contribution to the final 1x1 conv, accumulated in the resident
        # (C, HW) output block (its block index depends only on b, so it stays in VMEM
        # across the inner head axis and is written back to HBM once per batch).
        out_ref[...] += jnp.dot(w_ref[...], attng,
                                preferred_element_type=jnp.float32)

        @pl.when(i == nh - 1)
        def _finalize():
            out_ref[...] = x_ref[...] + sigma_ref[0, 0] * (out_ref[...] + battn_ref[...])

    return kernel


def fused_attention(theta, phi, g, x, w_attn_h, b_attn, sigma):
    """theta: (B,NH,J,K) bf16, phi: (B,NH,J,L) bf16, g: (B,NH,Jg,L) bf16,
    x: (B,C,HW) f32, w_attn_h: (NH,C,Jg) f32, b_attn: (C,1) f32, sigma: (1,1) f32.
    Returns out (B,C,HW) f32 and attention (B,NH,K,L) bf16."""
    B, NH, J, K = theta.shape
    L = phi.shape[-1]
    Jg = g.shape[2]
    C, HW = x.shape[1], x.shape[2]

    kernel = _make_attn_kernel(K, L)

    return pl.pallas_call(
        kernel,
        out_shape=(
            jax.ShapeDtypeStruct((B, C, HW), jnp.float32),        # out (residual)
            jax.ShapeDtypeStruct((B, NH, K, L), jnp.bfloat16),    # attention map
        ),
        # Batch OUTER (parallel -> one per TensorCore on v7x), head INNER (arbitrary ->
        # the (C, HW) out block accumulates across heads without HBM round trips).
        grid=(B, NH),
        in_specs=[
            pl.BlockSpec((None, None, J, K), lambda b, i: (b, i, 0, 0)),
            pl.BlockSpec((None, None, J, L), lambda b, i: (b, i, 0, 0)),
            pl.BlockSpec((None, None, Jg, L), lambda b, i: (b, i, 0, 0)),
            pl.BlockSpec((None, C, HW), lambda b, i: (b, 0, 0)),   # x: once per batch
            pl.BlockSpec((None, C, Jg), lambda b, i: (i, 0, 0)),   # per-head w_attn slice
            pl.BlockSpec((C, 1), lambda b, i: (0, 0)),
            pl.BlockSpec(memory_space=pltpu.MemorySpace.SMEM),     # sigma scalar
        ],
        out_specs=(
            pl.BlockSpec((None, C, HW), lambda b, i: (b, 0, 0)),
            pl.BlockSpec((None, None, K, L), lambda b, i: (b, i, 0, 0)),
        ),
        compiler_params=pltpu.CompilerParams(
            dimension_semantics=("parallel", "arbitrary"),
            vmem_limit_bytes=48 * 1024 * 1024),
    )(theta, phi, g, x, w_attn_h, b_attn, sigma)


# --------------------------------------------------------------------------- #
# Parameter / mask construction (plain JAX glue)
# --------------------------------------------------------------------------- #
def get_grid_masks(grid_o=(32, 32), grid_i=(16, 16)):
    # Deterministic banded stand-in for the YLG masks (same shape / 0-1 semantics).
    nO = grid_o[0] * grid_o[1]
    nI = grid_i[0] * grid_i[1]
    k = np.arange(nO)[:, None]
    l = np.arange(nI)[None, :]
    proj = (k * nI) // nO
    masks = []
    for m in range(8):
        if m < 4:   # "RTL"-style masks
            masks.append((l <= proj + (m % 2)).astype(np.float32))
        else:       # "LTR"-style masks
            masks.append((l >= proj - (m % 2)).astype(np.float32))
    return jnp.asarray(np.stack(masks, axis=0))


def _spectral_normalize(w, key, n_iter=1, eps=1e-12):
    # TODO(synk): torch SpectralNorm re-normalizes every forward with a persistent u
    # buffer; here one power iteration is applied once at init (glue, not hot path).
    u = jax.random.normal(key, (w.shape[0],), dtype=jnp.float32)
    u = u / (jnp.linalg.norm(u) + eps)
    v = None
    for _ in range(n_iter):
        v = w.T @ u
        v = v / (jnp.linalg.norm(v) + eps)
        u = w @ v
        u = u / (jnp.linalg.norm(u) + eps)
    sigma = u @ (w @ v)
    return w / sigma


def init_params(in_channels, key):
    def init_conv(k, cin, cout):
        k1, k2, k3 = jax.random.split(k, 3)
        bound = 1.0 / np.sqrt(cin)
        w = jax.random.uniform(k1, (cout, cin), minval=-bound, maxval=bound,
                               dtype=jnp.float32)
        b = jax.random.uniform(k2, (cout,), minval=-bound, maxval=bound,
                               dtype=jnp.float32)
        w = _spectral_normalize(w, k3)
        return w, b[:, None]        # channel-major: (Cout, Cin), (Cout, 1)

    k = jax.random.split(key, 4)
    C = in_channels
    w_theta, b_theta = init_conv(k[0], C, C // 8)
    w_phi, b_phi = init_conv(k[1], C, C // 8)
    w_g, b_g = init_conv(k[2], C, C // 2)
    w_attn, b_attn = init_conv(k[3], C // 2, C)

    return dict(
        w_qkv=jnp.concatenate([w_theta, w_phi, w_g], axis=0),   # (3C/4, C)
        b_qkv=jnp.concatenate([b_theta, b_phi, b_g], axis=0),   # (3C/4, 1)
        w_attn=w_attn, b_attn=b_attn,                           # (C, C//2), (C, 1)
        sigma=jnp.zeros((1, 1), jnp.float32),                   # nn.Parameter(zeros(1))
    )


# --------------------------------------------------------------------------- #
# Forward pass (mirrors Self_Attn_ylg.forward)
# --------------------------------------------------------------------------- #
def self_attn_ylg_forward(x_nchw, params):
    B, C, H, W = x_nchw.shape
    HW = H * W
    L = HW // 4
    NH = 8
    J = C // 64          # ch // (8 * 8)
    Jg = C // 16         # (ch // 2) // 8

    # NCHW -> channel-major flat: pure reshape, no transpose.
    x = x_nchw.reshape(B, C, HW)

    theta, phi, g = qkv_proj(x, params["w_qkv"], params["b_qkv"],
                             C // 8, C // 8, C // 2)

    # 2x2 max pool on the bf16 projections (exact in bf16; tiny XLA op).
    def maxpool2x2(t):
        cc = t.shape[1]
        tt = t.reshape(B, cc, H // 2, 2, W // 2, 2)
        return jnp.max(tt, axis=(3, 5)).reshape(B, cc, L)

    phi_p = maxpool2x2(phi)          # (B, C//8, L)
    g_p = maxpool2x2(g)              # (B, C//2, L)

    # torch's .view(-1, 8, ch//64, N) on NCHW-contiguous tensors == free reshapes here.
    theta_h = theta.reshape(B, NH, J, HW)
    phi_h = phi_p.reshape(B, NH, J, L)
    g_h = g_p.reshape(B, NH, Jg, L)

    # Per-head column slices of the final 1x1 conv weight: (NH, C, Jg).
    w_attn_h = params["w_attn"].reshape(C, NH, Jg).transpose(1, 0, 2)

    out, attn = fused_attention(theta_h, phi_h, g_h, x, w_attn_h,
                                params["b_attn"], params["sigma"])
    # out: (B, C, HW) f32 == x + sigma * conv1x1(attn_g);  attn: (B, 8, HW, L) bf16
    return out.reshape(B, C, H, W), attn


# --------------------------------------------------------------------------- #
# Pure-JAX reference (f32 end to end) for validation
# --------------------------------------------------------------------------- #
def reference_forward(x_nchw, params, mask_bias):
    B, C, H, W = x_nchw.shape
    HW = H * W
    L = HW // 4
    NH, J, Jg = 8, C // 64, C // 16
    c_th = c_ph = C // 8

    x = x_nchw.reshape(B, C, HW).astype(jnp.float32)
    y = jnp.einsum('oc,bcn->bon', params["w_qkv"], x) + params["b_qkv"][None]
    theta, phi, g = y[:, :c_th], y[:, c_th:c_th + c_ph], y[:, c_th + c_ph:]

    def pool(t):
        cc = t.shape[1]
        return t.reshape(B, cc, H // 2, 2, W // 2, 2).max(axis=(3, 5)).reshape(B, cc, L)

    theta_h = theta.reshape(B, NH, J, HW)
    phi_h = pool(phi).reshape(B, NH, J, L)
    g_h = pool(g).reshape(B, NH, Jg, L)

    attn1 = jnp.einsum('bijk,bijl->bikl', theta_h, phi_h) + mask_bias[None]
    attn = jax.nn.softmax(attn1, axis=-1)
    attn_g1 = jnp.einsum('bijk,bilk->bijl', g_h, attn)
    attn_g = attn_g1.reshape(B, C // 2, HW)
    h = jnp.einsum('oc,bcn->bon', params["w_attn"], attn_g) + params["b_attn"][None]
    out = x + params["sigma"][0, 0] * h
    return out.reshape(B, C, H, W), attn


# --------------------------------------------------------------------------- #
if __name__ == "__main__":
    # Masks are hard-coded for a 32x32 feature map; channels must be divisible by 64.
    B, C, H, W = 2, 128, 32, 32
    x = jax.random.normal(jax.random.PRNGKey(0), (B, C, H, W), dtype=jnp.float32)
    params = init_params(C, jax.random.PRNGKey(42))

    # sigma = 0 (module init): residual identity, softmax rows sum to 1.
    out, attn = self_attn_ylg_forward(x, params)
    out, attn = jax.block_until_ready((out, attn))
    assert out.shape == (B, C, H, W)
    assert attn.shape == (B, 8, H * W, H * W // 4)
    row_sums = jnp.sum(attn.astype(jnp.float32), axis=-1)
    assert bool(jnp.allclose(row_sums, 1.0, atol=2e-2))
    assert bool(jnp.allclose(out, x, atol=1e-5))

    # Non-trivial sigma: exercise the fused residual conv against a pure-JAX reference.
    params_s = dict(params, sigma=jnp.full((1, 1), 0.5, jnp.float32))
    out2, attn2 = self_attn_ylg_forward(x, params_s)
    out2, attn2 = jax.block_until_ready((out2, attn2))
    mask_bias = (1.0 - get_grid_masks((32, 32), (16, 16))) * (-1000.0)
    ref_out, ref_attn = reference_forward(x, params_s, mask_bias)
    assert bool(jnp.allclose(attn2.astype(jnp.float32), ref_attn, atol=2.5e-2))
    assert bool(jnp.allclose(out2, ref_out, atol=3e-2))

    print("KERNEL_OK")
</pallas_src>

<mosaic_0001>
module attributes {stable_mosaic.version = 11 : i64} {
  func.func @kernel(%arg0: i32, %arg1: memref<1x128x1024xf32, #tpu.memory_space<vmem>>, %arg2: memref<96x128xf32, #tpu.memory_space<vmem>>, %arg3: memref<96x1xf32, #tpu.memory_space<vmem>>, %arg4: memref<1x16x1024xbf16, #tpu.memory_space<vmem>>, %arg5: memref<1x16x1024xbf16, #tpu.memory_space<vmem>>, %arg6: memref<1x64x1024xbf16, #tpu.memory_space<vmem>>) attributes {dimension_semantics = [#tpu.dimension_semantics<parallel>], iteration_bounds = array<i64: 2>, scalar_prefetch = 0 : i64, scratch_operands = 0 : i64, tpu.core_type = #tpu.core_type<tc>, window_params = [{transform_indices = @transform_0, window_bounds = array<i64: 1, 128, 1024>}, {pipeline_mode = #tpu.pipeline_mode<synchronous>, transform_indices = @transform_1, window_bounds = array<i64: 96, 128>}, {pipeline_mode = #tpu.pipeline_mode<synchronous>, transform_indices = @transform_2, window_bounds = array<i64: 96, 1>}, {transform_indices = @transform_3, window_bounds = array<i64: 1, 16, 1024>}, {transform_indices = @transform_4, window_bounds = array<i64: 1, 16, 1024>}, {transform_indices = @transform_5, window_bounds = array<i64: 1, 64, 1024>}]} {
    %c0 = arith.constant 0 : index
    %c0_0 = arith.constant 0 : index
    %0 = vector.load %arg2[%c0, %c0_0] : memref<96x128xf32, #tpu.memory_space<vmem>>, vector<96x128xf32>
    %c0_1 = arith.constant 0 : index
    %c0_2 = arith.constant 0 : index
    %c0_3 = arith.constant 0 : index
    %1 = vector.load %arg1[%c0_1, %c0_2, %c0_3] : memref<1x128x1024xf32, #tpu.memory_space<vmem>>, vector<1x128x1024xf32>
    %2 = vector.shape_cast %1 : vector<1x128x1024xf32> to vector<128x1024xf32>
    %cst = arith.constant dense<0.000000e+00> : vector<96x1024xf32>
    %3 = tpu.matmul %0, %2, %cst {dimension_numbers = #tpu.dot_dimension_numbers<[1], [0], [0], [1], [0, 0, 1, 1], [], []>} : vector<96x128xf32>, vector<128x1024xf32>, vector<96x1024xf32> -> vector<96x1024xf32>
    %c0_4 = arith.constant 0 : index
    %c0_5 = arith.constant 0 : index
    %4 = vector.load %arg3[%c0_4, %c0_5] : memref<96x1xf32, #tpu.memory_space<vmem>>, vector<96x1xf32>
    %5 = vector.broadcast %4 : vector<96x1xf32> to vector<96x1024xf32>
    %6 = arith.addf %3, %5 : vector<96x1024xf32>
    %7 = vector.extract_strided_slice %6 {offsets = [0, 0], sizes = [16, 1024], strides = [1, 1]} : vector<96x1024xf32> to vector<16x1024xf32>
    %8 = arith.truncf %7 : vector<16x1024xf32> to vector<16x1024xbf16>
    %c0_6 = arith.constant 0 : index
    %c0_7 = arith.constant 0 : index
    %c0_8 = arith.constant 0 : index
    %9 = vector.load %arg4[%c0_6, %c0_7, %c0_8] : memref<1x16x1024xbf16, #tpu.memory_space<vmem>>, vector<1x16x1024xbf16>
    %10 = vector.shape_cast %9 : vector<1x16x1024xbf16> to vector<16x1024xbf16>
    %11 = vector.shape_cast %8 : vector<16x1024xbf16> to vector<1x16x1024xbf16>
    tpu.vector_store %arg4[%c0_6, %c0_7, %c0_8], %11 {strides = array<i32>} : memref<1x16x1024xbf16, #tpu.memory_space<vmem>>, vector<1x16x1024xbf16>,
    %12 = vector.extract_strided_slice %6 {offsets = [16, 0], sizes = [16, 1024], strides = [1, 1]} : vector<96x1024xf32> to vector<16x1024xf32>
    %13 = arith.truncf %12 : vector<16x1024xf32> to vector<16x1024xbf16>
    %c0_9 = arith.constant 0 : index
    %c0_10 = arith.constant 0 : index
    %c0_11 = arith.constant 0 : index
    %14 = vector.load %arg5[%c0_9, %c0_10, %c0_11] : memref<1x16x1024xbf16, #tpu.memory_space<vmem>>, vector<1x16x1024xbf16>
    %15 = vector.shape_cast %14 : vector<1x16x1024xbf16> to vector<16x1024xbf16>
    %16 = vector.shape_cast %13 : vector<16x1024xbf16> to vector<1x16x1024xbf16>
    tpu.vector_store %arg5[%c0_9, %c0_10, %c0_11], %16 {strides = array<i32>} : memref<1x16x1024xbf16, #tpu.memory_space<vmem>>, vector<1x16x1024xbf16>,
    %17 = vector.extract_strided_slice %6 {offsets = [32, 0], sizes = [64, 1024], strides = [1, 1]} : vector<96x1024xf32> to vector<64x1024xf32>
    %18 = arith.truncf %17 : vector<64x1024xf32> to vector<64x1024xbf16>
    %c0_12 = arith.constant 0 : index
    %c0_13 = arith.constant 0 : index
    %c0_14 = arith.constant 0 : index
    %19 = vector.load %arg6[%c0_12, %c0_13, %c0_14] : memref<1x64x1024xbf16, #tpu.memory_space<vmem>>, vector<1x64x1024xbf16>
    %20 = vector.shape_cast %19 : vector<1x64x1024xbf16> to vector<64x1024xbf16>
    %21 = vector.shape_cast %18 : vector<64x1024xbf16> to vector<1x64x1024xbf16>
    tpu.vector_store %arg6[%c0_12, %c0_13, %c0_14], %21 {strides = array<i32>} : memref<1x64x1024xbf16, #tpu.memory_space<vmem>>, vector<1x64x1024xbf16>,
    return
  }
  func.func @transform_0(%arg0: i32) -> (i32, i32, i32) {
    %c0_i32 = arith.constant 0 : i32
    %c0_i32_0 = arith.constant 0 : i32
    %c0_i32_1 = arith.constant 0 : i32
    return %arg0, %c0_i32, %c0_i32_0 : i32, i32, i32
  }
  func.func @transform_1(%arg0: i32) -> (i32, i32) {
    %c0_i32 = arith.constant 0 : i32
    %c0_i32_0 = arith.constant 0 : i32
    %c0_i32_1 = arith.constant 0 : i32
    return %c0_i32, %c0_i32_0 : i32, i32
  }
  func.func @transform_2(%arg0: i32) -> (i32, i32) {
    %c0_i32 = arith.constant 0 : i32
    %c0_i32_0 = arith.constant 0 : i32
    %c0_i32_1 = arith.constant 0 : i32
    return %c0_i32, %c0_i32_0 : i32, i32
  }
  func.func @transform_3(%arg0: i32) -> (i32, i32, i32) {
    %c0_i32 = arith.constant 0 : i32
    %c0_i32_0 = arith.constant 0 : i32
    %c0_i32_1 = arith.constant 0 : i32
    return %arg0, %c0_i32, %c0_i32_0 : i32, i32, i32
  }
  func.func @transform_4(%arg0: i32) -> (i32, i32, i32) {
    %c0_i32 = arith.constant 0 : i32
    %c0_i32_0 = arith.constant 0 : i32
    %c0_i32_1 = arith.constant 0 : i32
    return %arg0, %c0_i32, %c0_i32_0 : i32, i32, i32
  }
  func.func @transform_5(%arg0: i32) -> (i32, i32, i32) {
    %c0_i32 = arith.constant 0 : i32
    %c0_i32_0 = arith.constant 0 : i32
    %c0_i32_1 = arith.constant 0 : i32
    return %arg0, %c0_i32, %c0_i32_0 : i32, i32, i32
  }
}

</mosaic_0001>

<llo_original>
// kernel: tpu_custom_call.1
$region0: #{tpu_custom_call.1}
  #allocation0 [shape = 'u32[]', space=smem, size = 0x4, offset = 0x4, fixed_abs, tag = 'smem constant byte address 0x4 - core index']
  #allocation1 [shape = 'u32[144,128]{1,0:T(1,128)}', space=vmem, size = 0x12000, scoped, tag = 'internal scratch']
  %s0 = inlined_call_operand.hbm [shape: f32[2,128,1024], index: 0, kind: input, shape index: {}]
  %s1 = inlined_call_operand.vmem [shape: f32[96,128], index: 1, kind: input, shape index: {}]
  %s2 = inlined_call_operand.vmem [shape: f32[96,1], index: 2, kind: input, shape index: {}]
  %s3 = inlined_call_operand.hbm [shape: bf16[2,16,1024], index: 3, kind: output, shape index: {0}]
  %s4 = inlined_call_operand.hbm [shape: bf16[2,16,1024], index: 4, kind: output, shape index: {1}]
  %s5 = inlined_call_operand.hbm [shape: bf16[2,64,1024], index: 5, kind: output, shape index: {2}]
  %6 = xla_tuple %s3, %s4, %s5
  %s7 = sld [smem:[#allocation0]]
  $region65: #{tpu_custom_call.1} parent=0
    _
  %s9 = ssub.s32 1, %s7
  %s10 = scalar_select 0, %s9, %s7
  $region1: #{tpu_custom_call.1} parent=0
    #allocation2 [shape = 'u8[1048576]{0}', space=vmem, size = 0x100000, scoped, tag = 'input window, operand 0']
    #allocation3 [shape = 's32[2]{0}', space=sflag, size = 0x8, scoped, tag = 'scoped memory for tpu_custom_call.1']
    #allocation4 [shape = 's32[2]{0}', space=sflag, size = 0x8, scoped, tag = 'scoped memory for tpu_custom_call.1']
    #allocation5 [shape = 'u8[65536]{0}', space=vmem, size = 0x10000, scoped, tag = 'output window, operand 0']
    #allocation6 [shape = 'u8[65536]{0}', space=vmem, size = 0x10000, scoped, tag = 'output window, operand 1']
    #allocation7 [shape = 's32[2]{0}', space=sflag, size = 0x8, scoped, tag = 'scoped memory for tpu_custom_call.1']
    #allocation8 [shape = 'u8[262144]{0}', space=vmem, size = 0x40000, scoped, tag = 'output window, operand 2']
    %11 = vsyncpa [#allocation3], 0
    %s12 = scalar_lea.sflag [#allocation3], 1
    %13 = vsyncpa %s12, 0
    %14 = vsyncpa [#allocation4], 0
    %s15 = scalar_lea.sflag [#allocation4], 1
    %16 = vsyncpa %s15, 0
    %17 = vsyncpa [#allocation7], 0
    %s18 = scalar_lea.sflag [#allocation7], 1
    %19 = vsyncpa %s18, 0
    loop: start=0, step=1, limit=4
    $region2: #{tpu_custom_call.1} parent=1 // loop_pre_header
      _
    $region3: #{tpu_custom_call.1} parent=1 // loop_header
      %s21 = sphi 0, %s25
      %p22 = scmp.ge.s32.totalorder %s21, 4
      %s31 = sphi 0, %s33
      %s34 = sphi 0, %s31
      %s35 = sphi 0, %s34
      %s51 = sphi 0, %s35
      %s55 = sphi 0, %s55
      %s57 = sphi 0, %s55
      %s58 = sphi 0, %s57
      %s72 = sphi 0, %s58
      %s76 = sphi 0, %s76
      %s78 = sphi 0, %s76
      %s79 = sphi 0, %s78
      %s93 = sphi 0, %s79
      %s99 = sphi 0, %s101
      %s102 = sphi 0, %s99
      %s103 = sphi 0, %s102
      %s119 = sphi 0, %s103
      %s125 = sphi 0, %s127
      %s128 = sphi 0, %s125
      %s129 = sphi 0, %s128
      %s145 = sphi 0, %s129
      %s151 = sphi 0, %s153
      %s154 = sphi 0, %s151
      %s155 = sphi 0, %s154
      %s171 = sphi 0, %s155
    $region4: #{tpu_custom_call.1} parent=1 // loop_header_branch
      %24 = sbr.rel (%p22) target = $region8
    $region5: #{tpu_custom_call.1} parent=1 // loop_body
      %s26 = ssub.s32 %s21, 1
      %s27 = ssub.s32 %s21, 2
      %s28 = sadd.s32 %s21, 1
      %s29 = ssub.s32 %s21, %s28
      %p30 = scmp.eq.s32.totalorder %s29, 0
      %s32 = sadd.s32 %s31, 1
      %s33 = scalar_select %p30, %s31, %s32
      %p36 = pneg %p30
      %p37 = scmp.eq.s32.totalorder %s21, 1
      %p38 = por %p36, %p37
      %p39 = scmp.ne.s32.totalorder %s31, %s34
      %p40 = scmp.eq.s32.totalorder %s21, 0
      %p41 = por %p39, %p40
      %p42 = scmp.ne.s32.totalorder %s31, %s34
      %p43 = scmp.eq.s32.totalorder %s26, 1
      %p44 = por %p42, %p43
      %p45 = scmp.ne.s32.totalorder %s34, %s35
      %p46 = scmp.eq.s32.totalorder %s26, 0
      %p47 = por %p45, %p46
      %p48 = scmp.ne.s32.totalorder %s34, %s35
      %p49 = scmp.eq.s32.totalorder %s27, 1
      %p50 = por %p48, %p49
      %p52 = scmp.ne.s32.totalorder %s35, %s51
      %p53 = scmp.eq.s32.totalorder %s27, 0
      %p54 = por %p52, %p53
      %s56 = sadd.s32 %s55, 1
      %p59 = scmp.eq.s32.totalorder %s21, 1
      %p60 = scmp.ne.s32.totalorder %s55, %s57
      %p61 = scmp.eq.s32.totalorder %s21, 0
      %p62 = por %p60, %p61
      %p63 = scmp.ne.s32.totalorder %s55, %s57
      %p64 = scmp.eq.s32.totalorder %s26, 1
      %p65 = por %p63, %p64
      %p66 = scmp.ne.s32.totalorder %s57, %s58
      %p67 = scmp.eq.s32.totalorder %s26, 0
      %p68 = por %p66, %p67
      %p69 = scmp.ne.s32.totalorder %s57, %s58
      %p70 = scmp.eq.s32.totalorder %s27, 1
      %p71 = por %p69, %p70
      %p73 = scmp.ne.s32.totalorder %s58, %s72
      %p74 = scmp.eq.s32.totalorder %s27, 0
      %p75 = por %p73, %p74
      %s77 = sadd.s32 %s76, 1
      %p80 = scmp.eq.s32.totalorder %s21, 1
      %p81 = scmp.ne.s32.totalorder %s76, %s78
      %p82 = scmp.eq.s32.totalorder %s21, 0
      %p83 = por %p81, %p82
      %p84 = scmp.ne.s32.totalorder %s76, %s78
      %p85 = scmp.eq.s32.totalorder %s26, 1
      %p86 = por %p84, %p85
      %p87 = scmp.ne.s32.totalorder %s78, %s79
      %p88 = scmp.eq.s32.totalorder %s26, 0
      %p89 = por %p87, %p88
      %p90 = scmp.ne.s32.totalorder %s78, %s79
      %p91 = scmp.eq.s32.totalorder %s27, 1
      %p92 = por %p90, %p91
      %p94 = scmp.ne.s32.totalorder %s79, %s93
      %p95 = scmp.eq.s32.totalorder %s27, 0
      %p96 = por %p94, %p95
      %s97 = ssub.s32 %s21, %s28
      %p98 = scmp.eq.s32.totalorder %s97, 0
      %s100 = sadd.s32 %s99, 1
      %s101 = scalar_select %p98, %s99, %s100
      %p104 = pneg %p98
      %p105 = scmp.eq.s32.totalorder %s21, 1
      %p106 = por %p104, %p105
      %p107 = scmp.ne.s32.totalorder %s99, %s102
      %p108 = scmp.eq.s32.totalorder %s21, 0
      %p109 = por %p107, %p108
      %p110 = scmp.ne.s32.totalorder %s99, %s102
      %p111 = scmp.eq.s32.totalorder %s26, 1
      %p112 = por %p110, %p111
      %p113 = scmp.ne.s32.totalorder %s102, %s103
      %p114 = scmp.eq.s32.totalorder %s26, 0
      %p115 = por %p113, %p114
      %p116 = scmp.ne.s32.totalorder %s102, %s103
      %p117 = scmp.eq.s32.totalorder %s27, 1
      %p118 = por %p116, %p117
      %p120 = scmp.ne.s32.totalorder %s103, %s119
      %p121 = scmp.eq.s32.totalorder %s27, 0
      %p122 = por %p120, %p121
      %s123 = ssub.s32 %s21, %s28
      %p124 = scmp.eq.s32.totalorder %s123, 0
      %s126 = sadd.s32 %s125, 1
      %s127 = scalar_select %p124, %s125, %s126
      %p130 = pneg %p124
      %p131 = scmp.eq.s32.totalorder %s21, 1
      %p132 = por %p130, %p131
      %p133 = scmp.ne.s32.totalorder %s125, %s128
      %p134 = scmp.eq.s32.totalorder %s21, 0
      %p135 = por %p133, %p134
      %p136 = scmp.ne.s32.totalorder %s125, %s128
      %p137 = scmp.eq.s32.totalorder %s26, 1
      %p138 = por %p136, %p137
      %p139 = scmp.ne.s32.totalorder %s128, %s129
      %p140 = scmp.eq.s32.totalorder %s26, 0
      %p141 = por %p139, %p140
      %p142 = scmp.ne.s32.totalorder %s128, %s129
      %p143 = scmp.eq.s32.totalorder %s27, 1
      %p144 = por %p142, %p143
      %p146 = scmp.ne.s32.totalorder %s129, %s145
      %p147 = scmp.eq.s32.totalorder %s27, 0
      %p148 = por %p146, %p147
      %s149 = ssub.s32 %s21, %s28
      %p150 = scmp.eq.s32.totalorder %s149, 0
      %s152 = sadd.s32 %s151, 1
      %s153 = scalar_select %p150, %s151, %s152
      %p156 = pneg %p150
      %p157 = scmp.eq.s32.totalorder %s21, 1
      %p158 = por %p156, %p157
      %p159 = scmp.ne.s32.totalorder %s151, %s154
      %p160 = scmp.eq.s32.totalorder %s21, 0
      %p161 = por %p159, %p160
      %p162 = scmp.ne.s32.totalorder %s151, %s154
      %p163 = scmp.eq.s32.totalorder %s26, 1
      %p164 = por %p162, %p163
      %p165 = scmp.ne.s32.totalorder %s154, %s155
      %p166 = scmp.eq.s32.totalorder %s26, 0
      %p167 = por %p165, %p166
      %p168 = scmp.ne.s32.totalorder %s154, %s155
      %p169 = scmp.eq.s32.totalorder %s27, 1
      %p170 = por %p168, %p169
      %p172 = scmp.ne.s32.totalorder %s155, %s171
      %p173 = scmp.eq.s32.totalorder %s27, 0
      %p174 = por %p172, %p173
      %p175 = scmp.le.s32.totalorder 1, %s21
      %p176 = scmp.lt.s32.totalorder %s21, 3
      %p177 = pnand %p175, %p176
      %p178 = pneg %p177
      // Predicated region
      $region9: #{tpu_custom_call.1} parent=5 // pred_check
        _
      $region10: #{tpu_custom_call.1} parent=5 // pred_check_branch
        %180 = sbr.rel (%p177) target = $region12
      $region11: #{tpu_custom_call.1} parent=5 // pred_region
        %s181 = ssub.s32 %s21, 1
        // Predicated region
        $region13: #{tpu_custom_call.1} parent=11 // pred_check
          %p182 = pneg %p68
        $region14: #{tpu_custom_call.1} parent=11 // pred_check_branch
          %184 = sbr.rel (%p182) target = $region16
        $region15: #{tpu_custom_call.1} parent=11 // pred_region
          _
        $region16: #{tpu_custom_call.1} parent=11 // pred_fallthru
          _
        // Predicated region
        $region17: #{tpu_custom_call.1} parent=11 // pred_check
          %p185 = pneg %p89
        $region18: #{tpu_custom_call.1} parent=11 // pred_check_branch
          %187 = sbr.rel (%p185) target = $region20
        $region19: #{tpu_custom_call.1} parent=11 // pred_region
          _
        $region20: #{tpu_custom_call.1} parent=11 // pred_fallthru
          _
      $region12: #{tpu_custom_call.1} parent=5 // pred_fallthru
        _
      %p188 = scmp.lt.s32.totalorder %s21, 2
      // Predicated region
      $region21: #{tpu_custom_call.1} parent=5 // pred_check
        %p189 = pneg %p188
      $region22: #{tpu_custom_call.1} parent=5 // pred_check_branch
        %191 = sbr.rel (%p189) target = $region24
      $region23: #{tpu_custom_call.1} parent=5 // pred_region
        // Predicated region
        $region25: #{tpu_custom_call.1} parent=23 // pred_check
          %p192 = pneg %p41
        $region26: #{tpu_custom_call.1} parent=23 // pred_check_branch
          %194 = sbr.rel (%p192) target = $region28
        $region27: #{tpu_custom_call.1} parent=23 // pred_region
          %s195 = sand.u32 %s31, 1
          %s196 = scalar_lea.sflag [#allocation3], %s195
          %s197 = sand.u32 %s31, 1
          %s198 = smul.addr %s197, 1024
          %s199 = scalar_lea.vmem [#allocation2], %s198
          %s201 = ssub.s32 16384, 16384
          %202 = vsyncadd %s196, %s201
          %s203 = smul.addr %s21, 128
          %s204 = smul.addr %s203, 128
          %s205 = scalar_lea.hbm %s0, %s204
          %s206 = sshll.u32 %s199, 4
          %s207 = int_to_ptr.vmem [resolvable:$true] %s206
          %212 = dma.hbm_to_vmem [thread:$0]  %s205, 16384, %s207, %s196, 1024, 1024, 64
        $region28: #{tpu_custom_call.1} parent=23 // pred_fallthru
          _
      $region24: #{tpu_custom_call.1} parent=5 // pred_fallthru
        _
      %p213 = scmp.le.s32.totalorder 1, %s21
      %p214 = scmp.lt.s32.totalorder %s21, 3
      %p215 = pnand %p213, %p214
      %p216 = pneg %p215
      // Predicated region
      $region29: #{tpu_custom_call.1} parent=5 // pred_check
        _
      $region30: #{tpu_custom_call.1} parent=5 // pred_check_branch
        %218 = sbr.rel (%p215) target = $region32
      $region31: #{tpu_custom_call.1} parent=5 // pred_region
        %s219 = ssub.s32 %s21, 1
        %s220 = sand.u32 %s34, 1
        %s221 = scalar_lea.sflag [#allocation3], %s220
        %s222 = sand.u32 %s34, 1
        %s223 = smul.addr %s222, 1024
        %s224 = scalar_lea.vmem [#allocation2], %s223
        // Predicated region
        $region33: #{tpu_custom_call.1} parent=31 // pred_check
          %p225 = pneg %p47
        $region34: #{tpu_custom_call.1} parent=31 // pred_check_branch
          %227 = sbr.rel (%p225) target = $region36
        $region35: #{tpu_custom_call.1} parent=31 // pred_region
          %228 = dma.done %s221, 16384
        $region36: #{tpu_custom_call.1} parent=31 // pred_fallthru
          _
        %s229 = sand.u32 %s34, 1
        %s230 = scalar_lea.sflag [#allocation3], %s229
        %s231 = sand.u32 %s34, 1
        %s232 = smul.addr %s231, 1024
        %s233 = scalar_lea.vmem [#allocation2], %s232
        %p234 = pneg %p47
        %p235 = pneg %p44
        %p236 = pneg %p68
        %p237 = pneg %p65
        %p238 = pneg %p89
        %p239 = pneg %p86
        %p240 = pneg %p115
        %p241 = pneg %p112
        %s242 = sand.u32 %s102, 1
        %s243 = scalar_lea.sflag [#allocation4], %s242
        %s244 = sand.u32 %s102, 1
        %s245 = smul.addr %s244, 64
        %s246 = scalar_lea.vmem [#allocation5], %s245
        %p247 = pneg %p141
        %p248 = pneg %p138
        %s249 = sand.u32 %s26, 1
        %s250 = scalar_lea.sflag [#allocation7], %s249
        %s251 = sand.u32 %s128, 1
        %s252 = smul.addr %s251, 64
        %s253 = scalar_lea.vmem [#allocation6], %s252
        %p254 = pneg %p167
        %p255 = pneg %p164
        %s256 = sand.u32 %s26, 1
        %s257 = scalar_lea.sflag [#allocation7], %s256
        %s258 = sand.u32 %s154, 1
        %s259 = smul.addr %s258, 256
        %s260 = scalar_lea.vmem [#allocation8], %s259
        %v261 = vld [vmem:[%s1] sm:$0xff]
        %v262 = vld [vmem:[%s1 + $0x8] sm:$0xff]
        %v263 = vld [vmem:[%s1 + $0x10] sm:$0xff]
        %v264 = vld [vmem:[%s1 + $0x18] sm:$0xff]
        %v265 = vld [vmem:[%s1 + $0x20] sm:$0xff]
        %v266 = vld [vmem:[%s1 + $0x28] sm:$0xff]
        %v267 = vld [vmem:[%s1 + $0x30] sm:$0xff]
        %v268 = vld [vmem:[%s1 + $0x38] sm:$0xff]
        %v269 = vld [vmem:[%s1 + $0x40] sm:$0xff]
        %v270 = vld [vmem:[%s1 + $0x48] sm:$0xff]
        %v271 = vld [vmem:[%s1 + $0x50] sm:$0xff]
        %v272 = vld [vmem:[%s1 + $0x58] sm:$0xff]
        %v273 = vld [vmem:[%s224] sm:$0xff]
        %v274 = vld [vmem:[%s224 + $0x8] sm:$0xff]
        %v275 = vld [vmem:[%s224 + $0x10] sm:$0xff]
        %v276 = vld [vmem:[%s224 + $0x18] sm:$0xff]
        %v277 = vld [vmem:[%s224 + $0x20] sm:$0xff]
        %v278 = vld [vmem:[%s224 + $0x28] sm:$0xff]
        %v279 = vld [vmem:[%s224 + $0x30] sm:$0xff]
        %v280 = vld [vmem:[%s224 + $0x38] sm:$0xff]
        %v281 = vld [vmem:[%s224 + $0x40] sm:$0xff]
        %v282 = vld [vmem:[%s224 + $0x48] sm:$0xff]
        %v283 = vld [vmem:[%s224 + $0x50] sm:$0xff]
        %v284 = vld [vmem:[%s224 + $0x58] sm:$0xff]
        %v285 = vld [vmem:[%s224 + $0x60] sm:$0xff]
        %v286 = vld [vmem:[%s224 + $0x68] sm:$0xff]
        %v287 = vld [vmem:[%s224 + $0x70] sm:$0xff]
        %v288 = vld [vmem:[%s224 + $0x78] sm:$0xff]
        %v289 = vld [vmem:[%s224 + $0x80] sm:$0xff]
        %v290 = vld [vmem:[%s224 + $0x88] sm:$0xff]
        %v291 = vld [vmem:[%s224 + $0x90] sm:$0xff]
        %v292 = vld [vmem:[%s224 + $0x98] sm:$0xff]
        %v293 = vld [vmem:[%s224 + $0xa0] sm:$0xff]
        %v294 = vld [vmem:[%s224 + $0xa8] sm:$0xff]
        %v295 = vld [vmem:[%s224 + $0xb0] sm:$0xff]
        %v296 = vld [vmem:[%s224 + $0xb8] sm:$0xff]
        %v297 = vld [vmem:[%s224 + $0xc0] sm:$0xff]
        %v298 = vld [vmem:[%s224 + $0xc8] sm:$0xff]
        %v299 = vld [vmem:[%s224 + $0xd0] sm:$0xff]
        %v300 = vld [vmem:[%s224 + $0xd8] sm:$0xff]
        %v301 = vld [vmem:[%s224 + $0xe0] sm:$0xff]
        %v302 = vld [vmem:[%s224 + $0xe8] sm:$0xff]
        %v303 = vld [vmem:[%s224 + $0xf0] sm:$0xff]
        %v304 = vld [vmem:[%s224 + $0xf8] sm:$0xff]
        %v305 = vld [vmem:[%s224 + $0x100] sm:$0xff]
        %v306 = vld [vmem:[%s224 + $0x108] sm:$0xff]
        %v307 = vld [vmem:[%s224 + $0x110] sm:$0xff]
        %v308 = vld [vmem:[%s224 + $0x118] sm:$0xff]
        %v309 = vld [vmem:[%s224 + $0x120] sm:$0xff]
        %v310 = vld [vmem:[%s224 + $0x128] sm:$0xff]
        %v311 = vld [vmem:[%s224 + $0x130] sm:$0xff]
        %v312 = vld [vmem:[%s224 + $0x138] sm:$0xff]
        %v313 = vld [vmem:[%s224 + $0x140] sm:$0xff]
        %v314 = vld [vmem:[%s224 + $0x148] sm:$0xff]
        %v315 = vld [vmem:[%s224 + $0x150] sm:$0xff]
        %v316 = vld [vmem:[%s224 + $0x158] sm:$0xff]
        %v317 = vld [vmem:[%s224 + $0x160] sm:$0xff]
        %v318 = vld [vmem:[%s224 + $0x168] sm:$0xff]
        %v319 = vld [vmem:[%s224 + $0x170] sm:$0xff]
        %v320 = vld [vmem:[%s224 + $0x178] sm:$0xff]
        %v321 = vld [vmem:[%s224 + $0x180] sm:$0xff]
        %v322 = vld [vmem:[%s224 + $0x188] sm:$0xff]
        %v323 = vld [vmem:[%s224 + $0x190] sm:$0xff]
        %v324 = vld [vmem:[%s224 + $0x198] sm:$0xff]
        %v325 = vld [vmem:[%s224 + $0x1a0] sm:$0xff]
        %v326 = vld [vmem:[%s224 + $0x1a8] sm:$0xff]
        %v327 = vld [vmem:[%s224 + $0x1b0] sm:$0xff]
        %v328 = vld [vmem:[%s224 + $0x1b8] sm:$0xff]
        %v329 = vld [vmem:[%s224 + $0x1c0] sm:$0xff]
        %v330 = vld [vmem:[%s224 + $0x1c8] sm:$0xff]
        %v331 = vld [vmem:[%s224 + $0x1d0] sm:$0xff]
        %v332 = vld [vmem:[%s224 + $0x1d8] sm:$0xff]
        %v333 = vld [vmem:[%s224 + $0x1e0] sm:$0xff]
        %v334 = vld [vmem:[%s224 + $0x1e8] sm:$0xff]
        %v335 = vld [vmem:[%s224 + $0x1f0] sm:$0xff]
        %v336 = vld [vmem:[%s224 + $0x1f8] sm:$0xff]
        %v337 = vld [vmem:[%s224 + $0x200] sm:$0xff]
        %v338 = vld [vmem:[%s224 + $0x208] sm:$0xff]
        %v339 = vld [vmem:[%s224 + $0x210] sm:$0xff]
        %v340 = vld [vmem:[%s224 + $0x218] sm:$0xff]
        %v341 = vld [vmem:[%s224 + $0x220] sm:$0xff]
        %v342 = vld [vmem:[%s224 + $0x228] sm:$0xff]
        %v343 = vld [vmem:[%s224 + $0x230] sm:$0xff]
        %v344 = vld [vmem:[%s224 + $0x238] sm:$0xff]
        %v345 = vld [vmem:[%s224 + $0x240] sm:$0xff]
        %v346 = vld [vmem:[%s224 + $0x248] sm:$0xff]
        %v347 = vld [vmem:[%s224 + $0x250] sm:$0xff]
        %v348 = vld [vmem:[%s224 + $0x258] sm:$0xff]
        %v349 = vld [vmem:[%s224 + $0x260] sm:$0xff]
        %v350 = vld [vmem:[%s224 + $0x268] sm:$0xff]
        %v351 = vld [vmem:[%s224 + $0x270] sm:$0xff]
        %v352 = vld [vmem:[%s224 + $0x278] sm:$0xff]
        %v353 = vld [vmem:[%s224 + $0x280] sm:$0xff]
        %v354 = vld [vmem:[%s224 + $0x288] sm:$0xff]
        %v355 = vld [vmem:[%s224 + $0x290] sm:$0xff]
        %v356 = vld [vmem:[%s224 + $0x298] sm:$0xff]
        %v357 = vld [vmem:[%s224 + $0x2a0] sm:$0xff]
        %v358 = vld [vmem:[%s224 + $0x2a8] sm:$0xff]
        %v359 = vld [vmem:[%s224 + $0x2b0] sm:$0xff]
        %v360 = vld [vmem:[%s224 + $0x2b8] sm:$0xff]
        %v361 = vld [vmem:[%s224 + $0x2c0] sm:$0xff]
        %v362 = vld [vmem:[%s224 + $0x2c8] sm:$0xff]
        %v363 = vld [vmem:[%s224 + $0x2d0] sm:$0xff]
        %v364 = vld [vmem:[%s224 + $0x2d8] sm:$0xff]
        %v365 = vld [vmem:[%s224 + $0x2e0] sm:$0xff]
        %v366 = vld [vmem:[%s224 + $0x2e8] sm:$0xff]
        %v367 = vld [vmem:[%s224 + $0x2f0] sm:$0xff]
        %v368 = vld [vmem:[%s224 + $0x2f8] sm:$0xff]
        %v369 = vld [vmem:[%s224 + $0x300] sm:$0xff]
        %v370 = vld [vmem:[%s224 + $0x308] sm:$0xff]
        %v371 = vld [vmem:[%s224 + $0x310] sm:$0xff]
        %v372 = vld [vmem:[%s224 + $0x318] sm:$0xff]
        %v373 = vld [vmem:[%s224 + $0x320] sm:$0xff]
        %v374 = vld [vmem:[%s224 + $0x328] sm:$0xff]
        %v375 = vld [vmem:[%s224 + $0x330] sm:$0xff]
        %v376 = vld [vmem:[%s224 + $0x338] sm:$0xff]
        %v377 = vld [vmem:[%s224 + $0x340] sm:$0xff]
        %v378 = vld [vmem:[%s224 + $0x348] sm:$0xff]
        %v379 = vld [vmem:[%s224 + $0x350] sm:$0xff]
        %v380 = vld [vmem:[%s224 + $0x358] sm:$0xff]
        %v381 = vld [vmem:[%s224 + $0x360] sm:$0xff]
        %v382 = vld [vmem:[%s224 + $0x368] sm:$0xff]
        %v383 = vld [vmem:[%s224 + $0x370] sm:$0xff]
        %v384 = vld [vmem:[%s224 + $0x378] sm:$0xff]
        %v385 = vld [vmem:[%s224 + $0x380] sm:$0xff]
        %v386 = vld [vmem:[%s224 + $0x388] sm:$0xff]
        %v387 = vld [vmem:[%s224 + $0x390] sm:$0xff]
        %v388 = vld [vmem:[%s224 + $0x398] sm:$0xff]
        %v389 = vld [vmem:[%s224 + $0x3a0] sm:$0xff]
        %v390 = vld [vmem:[%s224 + $0x3a8] sm:$0xff]
        %v391 = vld [vmem:[%s224 + $0x3b0] sm:$0xff]
        %v392 = vld [vmem:[%s224 + $0x3b8] sm:$0xff]
        %v393 = vld [vmem:[%s224 + $0x3c0] sm:$0xff]
        %v394 = vld [vmem:[%s224 + $0x3c8] sm:$0xff]
        %v395 = vld [vmem:[%s224 + $0x3d0] sm:$0xff]
        %v396 = vld [vmem:[%s224 + $0x3d8] sm:$0xff]
        %v397 = vld [vmem:[%s224 + $0x3e0] sm:$0xff]
        %v398 = vld [vmem:[%s224 + $0x3e8] sm:$0xff]
        %v399 = vld [vmem:[%s224 + $0x3f0] sm:$0xff]
        %v400 = vld [vmem:[%s224 + $0x3f8] sm:$0xff]
        %v401 = vld [vmem:[%s2] sm:$0xff]
        %v402 = vld [vmem:[%s2 + $0x8] sm:$0xff]
        %v403 = vld [vmem:[%s2 + $0x10] sm:$0xff]
        %v404 = vld [vmem:[%s2 + $0x18] sm:$0xff]
        %v405 = vld [vmem:[%s2 + $0x20] sm:$0xff]
        %v406 = vld [vmem:[%s2 + $0x28] sm:$0xff]
        %v407 = vld [vmem:[%s2 + $0x30] sm:$0xff]
        %v408 = vld [vmem:[%s2 + $0x38] sm:$0xff]
        %v409 = vld [vmem:[%s2 + $0x40] sm:$0xff]
        %v410 = vld [vmem:[%s2 + $0x48] sm:$0xff]
        %v411 = vld [vmem:[%s2 + $0x50] sm:$0xff]
        %v412 = vld [vmem:[%s2 + $0x58] sm:$0xff]
        %414 = vset.pattern.permute.xlu0 0
        %415 = vperm.xlu0 %414, %v401
        %v416 = vpop.permute.xlu0 %415
        %419 = vset.pattern.permute.xlu0 0
        %420 = vperm.xlu0 %419, %v402
        %v421 = vpop.permute.xlu0 %420
        %424 = vset.pattern.permute.xlu0 0
        %425 = vperm.xlu0 %424, %v403
        %v426 = vpop.permute.xlu0 %425
        %429 = vset.pattern.permute.xlu0 0
        %430 = vperm.xlu0 %429, %v404
        %v431 = vpop.permute.xlu0 %430
        %434 = vset.pattern.permute.xlu0 0
        %435 = vperm.xlu0 %434, %v405
        %v436 = vpop.permute.xlu0 %435
        %439 = vset.pattern.permute.xlu0 0
        %440 = vperm.xlu0 %439, %v406
        %v441 = vpop.permute.xlu0 %440
        %444 = vset.pattern.permute.xlu0 0
        %445 = vperm.xlu0 %444, %v407
        %v446 = vpop.permute.xlu0 %445
        %449 = vset.pattern.permute.xlu0 0
        %450 = vperm.xlu0 %449, %v408
        %v451 = vpop.permute.xlu0 %450
        %454 = vset.pattern.permute.xlu0 0
        %455 = vperm.xlu0 %454, %v409
        %v456 = vpop.permute.xlu0 %455
        %459 = vset.pattern.permute.xlu0 0
        %460 = vperm.xlu0 %459, %v410
        %v461 = vpop.permute.xlu0 %460
        %464 = vset.pattern.permute.xlu0 0
        %465 = vperm.xlu0 %464, %v411
        %v466 = vpop.permute.xlu0 %465
        %469 = vset.pattern.permute.xlu0 0
        %470 = vperm.xlu0 %469, %v412
        %v471 = vpop.permute.xlu0 %470
        %473 = vmatprep.subr.mxu0 %v274
        %474 = vmatpush1.msra.mxu0 %v273
        %475 = vmatprep.subr.mxu0 %v282
        %476 = vmatpush1.msra.mxu0 %v281
        %477 = vmatprep.subr.mxu0 %v290
        %478 = vmatpush1.msra.mxu0 %v289
        %479 = vmatprep.subr.mxu0 %v298
        %480 = vmatpush1.msra.mxu0 %v297
        %481 = vmatprep.subr.mxu0 %v306
        %482 = vmatpush1.msra.mxu0 %v305
        %483 = vmatprep.subr.mxu0 %v314
        %484 = vmatpush1.msra.mxu0 %v313
        %485 = vmatprep.subr.mxu0 %v322
        %486 = vmatpush1.msra.mxu0 %v321
        %487 = vmatprep.subr.mxu0 %v330
        %488 = vmatpush1.msra.mxu0 %v329
        %489 = vmatprep.subr.mxu0 %v338
        %490 = vmatpush1.msra.mxu0 %v337
        %491 = vmatprep.subr.mxu0 %v346
        %492 = vmatpush1.msra.mxu0 %v345
        %493 = vmatprep.subr.mxu0 %v354
        %494 = vmatpush1.msra.mxu0 %v353
        %495 = vmatprep.subr.mxu0 %v362
        %496 = vmatpush1.msra.mxu0 %v361
        %497 = vmatprep.subr.mxu0 %v370
        %498 = vmatpush1.msra.mxu0 %v369
        %499 = vmatprep.subr.mxu0 %v378
        %500 = vmatpush1.msra.mxu0 %v377
        %501 = vmatprep.subr.mxu0 %v386
        %502 = vmatpush1.msra.mxu0 %v385
        %503 = vmatprep.subr.mxu0 %v394
        %504 = vmatpush1.msra.mxu0 %v393
        %505 = vmatprep.subr.mxu0 0.0
        %506 = vmatpush1.msra.mxu0 0.0
        %507 = vmatprep.subr.mxu0 0.0
        %508 = vmatpush1.msra.mxu0 0.0
        %509 = vmatprep.subr.mxu0 0.0
        %510 = vmatpush1.msra.mxu0 0.0
        %511 = vmatprep.subr.mxu0 0.0
        %512 = vmatpush1.msra.mxu0 0.0
        %513 = vmatprep.subr.mxu0 0.0
        %514 = vmatpush1.msra.mxu0 0.0
        %515 = vmatprep.subr.mxu0 0.0
        %516 = vmatpush1.msra.mxu0 0.0
        %517 = vmatprep.subr.mxu0 0.0
        %518 = vmatpush1.msra.mxu0 0.0
        %519 = vmatprep.subr.mxu0 0.0
        %520 = vmatpush1.msra.mxu0 0.0
        %521 = vmatprep.subr.mxu0 0.0
        %522 = vmatpush1.msra.mxu0 0.0
        %523 = vmatprep.subr.mxu0 0.0
        %524 = vmatpush1.msra.mxu0 0.0
        %525 = vmatprep.subr.mxu0 0.0
        %526 = vmatpush1.msra.mxu0 0.0
        %527 = vmatprep.subr.mxu0 0.0
        %528 = vmatpush1.msra.mxu0 0.0
        %529 = vmatprep.subr.mxu0 0.0
        %530 = vmatpush1.msra.mxu0 0.0
        %531 = vmatprep.subr.mxu0 0.0
        %532 = vmatpush1.msra.mxu0 0.0
        %533 = vmatprep.subr.mxu0 0.0
        %534 = vmatpush1.msra.mxu0 0.0
        %535 = vmatprep.subr.mxu0 0.0
        %536 = vmatpush1.msra.mxu0 0.0
        %537 = vmatprep.mubr.f32.mxu0 0.0
        %538 = vmatmul.mubr.f32.gmra.mrb[0].mxu0 %v261
        %v539 = vpop.f32.mrb[0].mxu0
        %v540 = vadd.f32 %v416, %v539
        %v541 = vpop.f32.mrb[0].mxu0
        %v542 = vadd.f32 %v416, %v541
        %543 = vmatprep.mubr.f32.mxu0 0.0
        %544 = vmatmul.mubr.f32.gmra.mrb[0].mxu0 %v262
        %v545 = vpop.f32.mrb[0].mxu0
        %v546 = vadd.f32 %v421, %v545
        %v547 = vpop.f32.mrb[0].mxu0
        %v548 = vadd.f32 %v421, %v547
        %549 = vmatprep.mubr.f32.mxu0 0.0
        %550 = vmatmul.mubr.f32.gmra.mrb[0].mxu0 %v263
        %v551 = vpop.f32.mrb[0].mxu0
        %v552 = vadd.f32 %v426, %v551
        %v553 = vpop.f32.mrb[0].mxu0
        %v554 = vadd.f32 %v426, %v553
        %555 = vmatprep.mubr.f32.mxu0 0.0
        %556 = vmatmul.mubr.f32.gmra.mrb[0].mxu0 %v264
        %v557 = vpop.f32.mrb[0].mxu0
        %v558 = vadd.f32 %v431, %v557
        %v559 = vpop.f32.mrb[0].mxu0
        %v560 = vadd.f32 %v431, %v559
        %561 = vmatprep.mubr.f32.mxu0 0.0
        %562 = vmatmul.mubr.f32.gmra.mrb[0].mxu0 %v265
        %v563 = vpop.f32.mrb[0].mxu0
        %v564 = vadd.f32 %v436, %v563
        %v565 = vpop.f32.mrb[0].mxu0
        %v566 = vadd.f32 %v436, %v565
        %567 = vmatprep.mubr.f32.mxu0 0.0
        %568 = vmatmul.mubr.f32.gmra.mrb[0].mxu0 %v266
        %v569 = vpop.f32.mrb[0].mxu0
        %v570 = vadd.f32 %v441, %v569
        %v571 = vpop.f32.mrb[0].mxu0
        %v572 = vadd.f32 %v441, %v571
        %573 = vmatprep.mubr.f32.mxu0 0.0
        %574 = vmatmul.mubr.f32.gmra.mrb[0].mxu0 %v267
        %v575 = vpop.f32.mrb[0].mxu0
        %v576 = vadd.f32 %v446, %v575
        %v577 = vpop.f32.mrb[0].mxu0
        %v578 = vadd.f32 %v446, %v577
        %579 = vmatprep.mubr.f32.mxu0 0.0
        %580 = vmatmul.mubr.f32.gmra.mrb[0].mxu0 %v268
        %v581 = vpop.f32.mrb[0].mxu0
        %v582 = vadd.f32 %v451, %v581
        %v583 = vpop.f32.mrb[0].mxu0
        %v584 = vadd.f32 %v451, %v583
        %585 = vmatprep.mubr.f32.mxu0 0.0
        %586 = vmatmul.mubr.f32.gmra.mrb[0].mxu0 %v269
        %v587 = vpop.f32.mrb[0].mxu0
        %v588 = vadd.f32 %v456, %v587
        %v589 = vpop.f32.mrb[0].mxu0
        %v590 = vadd.f32 %v456, %v589
        %591 = vmatprep.mubr.f32.mxu0 0.0
        %592 = vmatmul.mubr.f32.gmra.mrb[0].mxu0 %v270
        %v593 = vpop.f32.mrb[0].mxu0
        %v594 = vadd.f32 %v461, %v593
        %v595 = vpop.f32.mrb[0].mxu0
        %v596 = vadd.f32 %v461, %v595
        %597 = vmatprep.mubr.f32.mxu0 0.0
        %598 = vmatmul.mubr.f32.gmra.mrb[0].mxu0 %v271
        %v599 = vpop.f32.mrb[0].mxu0
        %v600 = vadd.f32 %v466, %v599
        %v601 = vpop.f32.mrb[0].mxu0
        %v602 = vadd.f32 %v466, %v601
        %603 = vmatprep.mubr.f32.mxu0 0.0
        %604 = vmatmul.mubr.f32.gmra.mrb[0].mxu0 %v272
        %v605 = vpop.f32.mrb[0].mxu0
        %v606 = vadd.f32 %v471, %v605
        %v607 = vpop.f32.mrb[0].mxu0
        %v608 = vadd.f32 %v471, %v607
        %609 = vdwg.mxu0
        %610 = vmatprep.subr.mxu0 %v276
        %611 = vmatpush1.msra.mxu0 %v275
        %612 = vmatprep.subr.mxu0 %v284
        %613 = vmatpush1.msra.mxu0 %v283
        %614 = vmatprep.subr.mxu0 %v292
        %615 = vmatpush1.msra.mxu0 %v291
        %616 = vmatprep.subr.mxu0 %v300
        %617 = vmatpush1.msra.mxu0 %v299
        %618 = vmatprep.subr.mxu0 %v308
        %619 = vmatpush1.msra.mxu0 %v307
        %620 = vmatprep.subr.mxu0 %v316
        %621 = vmatpush1.msra.mxu0 %v315
        %622 = vmatprep.subr.mxu0 %v324
        %623 = vmatpush1.msra.mxu0 %v323
        %624 = vmatprep.subr.mxu0 %v332
        %625 = vmatpush1.msra.mxu0 %v331
        %626 = vmatprep.subr.mxu0 %v340
        %627 = vmatpush1.msra.mxu0 %v339
        %628 = vmatprep.subr.mxu0 %v348
        %629 = vmatpush1.msra.mxu0 %v347
        %630 = vmatprep.subr.mxu0 %v356
        %631 = vmatpush1.msra.mxu0 %v355
        %632 = vmatprep.subr.mxu0 %v364
        %633 = vmatpush1.msra.mxu0 %v363
        %634 = vmatprep.subr.mxu0 %v372
        %635 = vmatpush1.msra.mxu0 %v371
        %636 = vmatprep.subr.mxu0 %v380
        %637 = vmatpush1.msra.mxu0 %v379
        %638 = vmatprep.subr.mxu0 %v388
        %639 = vmatpush1.msra.mxu0 %v387
        %640 = vmatprep.subr.mxu0 %v396
        %641 = vmatpush1.msra.mxu0 %v395
        %642 = vmatprep.subr.mxu0 0.0
        %643 = vmatpush1.msra.mxu0 0.0
        %644 = vmatprep.subr.mxu0 0.0
        %645 = vmatpush1.msra.mxu0 0.0
        %646 = vmatprep.subr.mxu0 0.0
        %647 = vmatpush1.msra.mxu0 0.0
        %648 = vmatprep.subr.mxu0 0.0
        %649 = vmatpush1.msra.mxu0 0.0
        %650 = vmatprep.subr.mxu0 0.0
        %651 = vmatpush1.msra.mxu0 0.0
        %652 = vmatprep.subr.mxu0 0.0
        %653 = vmatpush1.msra.mxu0 0.0
        %654 = vmatprep.subr.mxu0 0.0
        %655 = vmatpush1.msra.mxu0 0.0
        %656 = vmatprep.subr.mxu0 0.0
        %657 = vmatpush1.msra.mxu0 0.0
        %658 = vmatprep.subr.mxu0 0.0
        %659 = vmatpush1.msra.mxu0 0.0
        %660 = vmatprep.subr.mxu0 0.0
        %661 = vmatpush1.msra.mxu0 0.0
        %662 = vmatprep.subr.mxu0 0.0
        %663 = vmatpush1.msra.mxu0 0.0
        %664 = vmatprep.subr.mxu0 0.0
        %665 = vmatpush1.msra.mxu0 0.0
        %666 = vmatprep.subr.mxu0 0.0
        %667 = vmatpush1.msra.mxu0 0.0
        %668 = vmatprep.subr.mxu0 0.0
        %669 = vmatpush1.msra.mxu0 0.0
        %670 = vmatprep.subr.mxu0 0.0
        %671 = vmatpush1.msra.mxu0 0.0
        %672 = vmatprep.subr.mxu0 0.0
        %673 = vmatpush1.msra.mxu0 0.0
        %674 = vmatprep.mubr.f32.mxu0 0.0
        %675 = vmatmul.mubr.f32.gmra.mrb[0].mxu0 %v261
        %v676 = vpop.f32.mrb[0].mxu0
        %v677 = vadd.f32 %v416, %v676
        %v678 = vpop.f32.mrb[0].mxu0
        %v679 = vadd.f32 %v416, %v678
        %680 = vmatprep.mubr.f32.mxu0 0.0
        %681 = vmatmul.mubr.f32.gmra.mrb[0].mxu0 %v262
        %v682 = vpop.f32.mrb[0].mxu0
        %v683 = vadd.f32 %v421, %v682
        %v684 = vpop.f32.mrb[0].mxu0
        %v685 = vadd.f32 %v421, %v684
        %686 = vmatprep.mubr.f32.mxu0 0.0
        %687 = vmatmul.mubr.f32.gmra.mrb[0].mxu0 %v263
        %v688 = vpop.f32.mrb[0].mxu0
        %v689 = vadd.f32 %v426, %v688
        %v690 = vpop.f32.mrb[0].mxu0
        %v691 = vadd.f32 %v426, %v690
        %692 = vmatprep.mubr.f32.mxu0 0.0
        %693 = vmatmul.mubr.f32.gmra.mrb[0].mxu0 %v264
        %v694 = vpop.f32.mrb[0].mxu0
        %v695 = vadd.f32 %v431, %v694
        %v696 = vpop.f32.mrb[0].mxu0
        %v697 = vadd.f32 %v431, %v696
        %698 = vmatprep.mubr.f32.mxu0 0.0
        %699 = vmatmul.mubr.f32.gmra.mrb[0].mxu0 %v265
        %v700 = vpop.f32.mrb[0].mxu0
        %v701 = vadd.f32 %v436, %v700
        %v702 = vpop.f32.mrb[0].mxu0
        %v703 = vadd.f32 %v436, %v702
        %704 = vmatprep.mubr.f32.mxu0 0.0
        %705 = vmatmul.mubr.f32.gmra.mrb[0].mxu0 %v266
        %v706 = vpop.f32.mrb[0].mxu0
        %v707 = vadd.f32 %v441, %v706
        %v708 = vpop.f32.mrb[0].mxu0
        %v709 = vadd.f32 %v441, %v708
        %710 = vmatprep.mubr.f32.mxu0 0.0
        %711 = vmatmul.mubr.f32.gmra.mrb[0].mxu0 %v267
        %v712 = vpop.f32.mrb[0].mxu0
        %v713 = vadd.f32 %v446, %v712
        %v714 = vpop.f32.mrb[0].mxu0
        %v715 = vadd.f32 %v446, %v714
        %716 = vmatprep.mubr.f32.mxu0 0.0
        %717 = vmatmul.mubr.f32.gmra.mrb[0].mxu0 %v268
        %v718 = vpop.f32.mrb[0].mxu0
        %v719 = vadd.f32 %v451, %v718
        %v720 = vpop.f32.mrb[0].mxu0
        %v721 = vadd.f32 %v451, %v720
        %722 = vmatprep.mubr.f32.mxu0 0.0
        %723 = vmatmul.mubr.f32.gmra.mrb[0].mxu0 %v269
        %v724 = vpop.f32.mrb[0].mxu0
        %v725 = vadd.f32 %v456, %v724
        %v726 = vpop.f32.mrb[0].mxu0
        %v727 = vadd.f32 %v456, %v726
        %728 = vmatprep.mubr.f32.mxu0 0.0
        %729 = vmatmul.mubr.f32.gmra.mrb[0].mxu0 %v270
        %v730 = vpop.f32.mrb[0].mxu0
        %v731 = vadd.f32 %v461, %v730
        %v732 = vpop.f32.mrb[0].mxu0
        %v733 = vadd.f32 %v461, %v732
        %734 = vmatprep.mubr.f32.mxu0 0.0
        %735 = vmatmul.mubr.f32.gmra.mrb[0].mxu0 %v271
        %v736 = vpop.f32.mrb[0].mxu0
        %v737 = vadd.f32 %v466, %v736
        %v738 = vpop.f32.mrb[0].mxu0
        %v739 = vadd.f32 %v466, %v738
        %740 = vmatprep.mubr.f32.mxu0 0.0
        %741 = vmatmul.mubr.f32.gmra.mrb[0].mxu0 %v272
        %v742 = vpop.f32.mrb[0].mxu0
        %v743 = vadd.f32 %v471, %v742
        %v744 = vpop.f32.mrb[0].mxu0
        %v745 = vadd.f32 %v471, %v744
        %746 = vdwg.mxu0
        %747 = vmatprep.subr.mxu0 %v278
        %748 = vmatpush1.msra.mxu0 %v277
        %749 = vmatprep.subr.mxu0 %v286
        %750 = vmatpush1.msra.mxu0 %v285
        %751 = vmatprep.subr.mxu0 %v294
        %752 = vmatpush1.msra.mxu0 %v293
        %753 = vmatprep.subr.mxu0 %v302
        %754 = vmatpush1.msra.mxu0 %v301
        %755 = vmatprep.subr.mxu0 %v310
        %756 = vmatpush1.msra.mxu0 %v309
        %757 = vmatprep.subr.mxu0 %v318
        %758 = vmatpush1.msra.mxu0 %v317
        %759 = vmatprep.subr.mxu0 %v326
        %760 = vmatpush1.msra.mxu0 %v325
        %761 = vmatprep.subr.mxu0 %v334
        %762 = vmatpush1.msra.mxu0 %v333
        %763 = vmatprep.subr.mxu0 %v342
        %764 = vmatpush1.msra.mxu0 %v341
        %765 = vmatprep.subr.mxu0 %v350
        %766 = vmatpush1.msra.mxu0 %v349
        %767 = vmatprep.subr.mxu0 %v358
        %768 = vmatpush1.msra.mxu0 %v357
        %769 = vmatprep.subr.mxu0 %v366
        %770 = vmatpush1.msra.mxu0 %v365
        %771 = vmatprep.subr.mxu0 %v374
        %772 = vmatpush1.msra.mxu0 %v373
        %773 = vmatprep.subr.mxu0 %v382
        %774 = vmatpush1.msra.mxu0 %v381
        %775 = vmatprep.subr.mxu0 %v390
        %776 = vmatpush1.msra.mxu0 %v389
        %777 = vmatprep.subr.mxu0 %v398
        %778 = vmatpush1.msra.mxu0 %v397
        %779 = vmatprep.subr.mxu0 0.0
        %780 = vmatpush1.msra.mxu0 0.0
        %781 = vmatprep.subr.mxu0 0.0
        %782 = vmatpush1.msra.mxu0 0.0
        %783 = vmatprep.subr.mxu0 0.0
        %784 = vmatpush1.msra.mxu0 0.0
        %785 = vmatprep.subr.mxu0 0.0
        %786 = vmatpush1.msra.mxu0 0.0
        %787 = vmatprep.subr.mxu0 0.0
        %788 = vmatpush1.msra.mxu0 0.0
        %789 = vmatprep.subr.mxu0 0.0
        %790 = vmatpush1.msra.mxu0 0.0
        %791 = vmatprep.subr.mxu0 0.0
        %792 = vmatpush1.msra.mxu0 0.0
        %793 = vmatprep.subr.mxu0 0.0
        %794 = vmatpush1.msra.mxu0 0.0
        %795 = vmatprep.subr.mxu0 0.0
        %796 = vmatpush1.msra.mxu0 0.0
        %797 = vmatprep.subr.mxu0 0.0
        %798 = vmatpush1.msra.mxu0 0.0
        %799 = vmatprep.subr.mxu0 0.0
        %800 = vmatpush1.msra.mxu0 0.0
        %801 = vmatprep.subr.mxu0 0.0
        %802 = vmatpush1.msra.mxu0 0.0
        %803 = vmatprep.subr.mxu0 0.0
        %804 = vmatpush1.msra.mxu0 0.0
        %805 = vmatprep.subr.mxu0 0.0
        %806 = vmatpush1.msra.mxu0 0.0
        %807 = vmatprep.subr.mxu0 0.0
        %808 = vmatpush1.msra.mxu0 0.0
        %809 = vmatprep.subr.mxu0 0.0
        %810 = vmatpush1.msra.mxu0 0.0
        %811 = vmatprep.mubr.f32.mxu0 0.0
        %812 = vmatmul.mubr.f32.gmra.mrb[0].mxu0 %v261
        %v813 = vpop.f32.mrb[0].mxu0
        %v814 = vadd.f32 %v416, %v813
        %v815 = vpop.f32.mrb[0].mxu0
        %v816 = vadd.f32 %v416, %v815
        %817 = vmatprep.mubr.f32.mxu0 0.0
        %818 = vmatmul.mubr.f32.gmra.mrb[0].mxu0 %v262
        %v819 = vpop.f32.mrb[0].mxu0
        %v820 = vadd.f32 %v421, %v819
        %v821 = vpop.f32.mrb[0].mxu0
        %v822 = vadd.f32 %v421, %v821
        %823 = vmatprep.mubr.f32.mxu0 0.0
        %824 = vmatmul.mubr.f32.gmra.mrb[0].mxu0 %v263
        %v825 = vpop.f32.mrb[0].mxu0
        %v826 = vadd.f32 %v426, %v825
        %v827 = vpop.f32.mrb[0].mxu0
        %v828 = vadd.f32 %v426, %v827
        %829 = vmatprep.mubr.f32.mxu0 0.0
        %830 = vmatmul.mubr.f32.gmra.mrb[0].mxu0 %v264
        %v831 = vpop.f32.mrb[0].mxu0
        %v832 = vadd.f32 %v431, %v831
        %v833 = vpop.f32.mrb[0].mxu0
        %v834 = vadd.f32 %v431, %v833
        %835 = vmatprep.mubr.f32.mxu0 0.0
        %836 = vmatmul.mubr.f32.gmra.mrb[0].mxu0 %v265
        %v837 = vpop.f32.mrb[0].mxu0
        %v838 = vadd.f32 %v436, %v837
        %v839 = vpop.f32.mrb[0].mxu0
        %v840 = vadd.f32 %v436, %v839
        %841 = vmatprep.mubr.f32.mxu0 0.0
        %842 = vmatmul.mubr.f32.gmra.mrb[0].mxu0 %v266
        %v843 = vpop.f32.mrb[0].mxu0
        %v844 = vadd.f32 %v441, %v843
        %v845 = vpop.f32.mrb[0].mxu0
        %v846 = vadd.f32 %v441, %v845
        %847 = vmatprep.mubr.f32.mxu0 0.0
        %848 = vmatmul.mubr.f32.gmra.mrb[0].mxu0 %v267
        %v849 = vpop.f32.mrb[0].mxu0
        %v850 = vadd.f32 %v446, %v849
        %v851 = vpop.f32.mrb[0].mxu0
        %v852 = vadd.f32 %v446, %v851
        %853 = vmatprep.mubr.f32.mxu0 0.0
        %854 = vmatmul.mubr.f32.gmra.mrb[0].mxu0 %v268
        %v855 = vpop.f32.mrb[0].mxu0
        %v856 = vadd.f32 %v451, %v855
        %v857 = vpop.f32.mrb[0].mxu0
        %v858 = vadd.f32 %v451, %v857
        %859 = vmatprep.mubr.f32.mxu0 0.0
        %860 = vmatmul.mubr.f32.gmra.mrb[0].mxu0 %v269
        %v861 = vpop.f32.mrb[0].mxu0
        %v862 = vadd.f32 %v456, %v861
        %v863 = vpop.f32.mrb[0].mxu0
        %v864 = vadd.f32 %v456, %v863
        %865 = vmatprep.mubr.f32.mxu0 0.0
        %866 = vmatmul.mubr.f32.gmra.mrb[0].mxu0 %v270
        %v867 = vpop.f32.mrb[0].mxu0
        %v868 = vadd.f32 %v461, %v867
        %v869 = vpop.f32.mrb[0].mxu0
        %v870 = vadd.f32 %v461, %v869
        %871 = vmatprep.mubr.f32.mxu0 0.0
        %872 = vmatmul.mubr.f32.gmra.mrb[0].mxu0 %v271
        %v873 = vpop.f32.mrb[0].mxu0
        %v874 = vadd.f32 %v466, %v873
        %v875 = vpop.f32.mrb[0].mxu0
        %v876 = vadd.f32 %v466, %v875
        %877 = vmatprep.mubr.f32.mxu0 0.0
        %878 = vmatmul.mubr.f32.gmra.mrb[0].mxu0 %v272
        %v879 = vpop.f32.mrb[0].mxu0
        %v880 = vadd.f32 %v471, %v879
        %v881 = vpop.f32.mrb[0].mxu0
        %v882 = vadd.f32 %v471, %v881
        %883 = vdwg.mxu0
        %884 = vmatprep.subr.mxu0 %v280
        %885 = vmatpush1.msra.mxu0 %v279
        %886 = vmatprep.subr.mxu0 %v288
        %887 = vmatpush1.msra.mxu0 %v287
        %888 = vmatprep.subr.mxu0 %v296
        %889 = vmatpush1.msra.mxu0 %v295
        %890 = vmatprep.subr.mxu0 %v304
        %891 = vmatpush1.msra.mxu0 %v303
        %892 = vmatprep.subr.mxu0 %v312
        %893 = vmatpush1.msra.mxu0 %v311
        %894 = vmatprep.subr.mxu0 %v320
        %895 = vmatpush1.msra.mxu0 %v319
        %896 = vmatprep.subr.mxu0 %v328
        %897 = vmatpush1.msra.mxu0 %v327
        %898 = vmatprep.subr.mxu0 %v336
        %899 = vmatpush1.msra.mxu0 %v335
        %900 = vmatprep.subr.mxu0 %v344
        %901 = vmatpush1.msra.mxu0 %v343
        %902 = vmatprep.subr.mxu0 %v352
        %903 = vmatpush1.msra.mxu0 %v351
        %904 = vmatprep.subr.mxu0 %v360
        %905 = vmatpush1.msra.mxu0 %v359
        %906 = vmatprep.subr.mxu0 %v368
        %907 = vmatpush1.msra.mxu0 %v367
        %908 = vmatprep.subr.mxu0 %v376
        %909 = vmatpush1.msra.mxu0 %v375
        %910 = vmatprep.subr.mxu0 %v384
        %911 = vmatpush1.msra.mxu0 %v383
        %912 = vmatprep.subr.mxu0 %v392
        %913 = vmatpush1.msra.mxu0 %v391
        %914 = vmatprep.subr.mxu0 %v400
        %915 = vmatpush1.msra.mxu0 %v399
        %916 = vmatprep.subr.mxu0 0.0
        %917 = vmatpush1.msra.mxu0 0.0
        %918 = vmatprep.subr.mxu0 0.0
        %919 = vmatpush1.msra.mxu0 0.0
        %920 = vmatprep.subr.mxu0 0.0
        %921 = vmatpush1.msra.mxu0 0.0
        %922 = vmatprep.subr.mxu0 0.0
        %923 = vmatpush1.msra.mxu0 0.0
        %924 = vmatprep.subr.mxu0 0.0
        %925 = vmatpush1.msra.mxu0 0.0
        %926 = vmatprep.subr.mxu0 0.0
        %927 = vmatpush1.msra.mxu0 0.0
        %928 = vmatprep.subr.mxu0 0.0
        %929 = vmatpush1.msra.mxu0 0.0
        %930 = vmatprep.subr.mxu0 0.0
        %931 = vmatpush1.msra.mxu0 0.0
        %932 = vmatprep.subr.mxu0 0.0
        %933 = vmatpush1.msra.mxu0 0.0
        %934 = vmatprep.subr.mxu0 0.0
        %935 = vmatpush1.msra.mxu0 0.0
        %936 = vmatprep.subr.mxu0 0.0
        %937 = vmatpush1.msra.mxu0 0.0
        %938 = vmatprep.subr.mxu0 0.0
        %939 = vmatpush1.msra.mxu0 0.0
        %940 = vmatprep.subr.mxu0 0.0
        %941 = vmatpush1.msra.mxu0 0.0
        %942 = vmatprep.subr.mxu0 0.0
        %943 = vmatpush1.msra.mxu0 0.0
        %944 = vmatprep.subr.mxu0 0.0
        %945 = vmatpush1.msra.mxu0 0.0
        %946 = vmatprep.subr.mxu0 0.0
        %947 = vmatpush1.msra.mxu0 0.0
        %948 = vmatprep.mubr.f32.mxu0 0.0
        %949 = vmatmul.mubr.f32.gmra.mrb[0].mxu0 %v261
        %v950 = vpop.f32.mrb[0].mxu0
        %v951 = vadd.f32 %v416, %v950
        %v952 = vpop.f32.mrb[0].mxu0
        %v953 = vadd.f32 %v416, %v952
        %954 = vmatprep.mubr.f32.mxu0 0.0
        %955 = vmatmul.mubr.f32.gmra.mrb[0].mxu0 %v262
        %v956 = vpop.f32.mrb[0].mxu0
        %v957 = vadd.f32 %v421, %v956
        %v958 = vpop.f32.mrb[0].mxu0
        %v959 = vadd.f32 %v421, %v958
        %960 = vmatprep.mubr.f32.mxu0 0.0
        %961 = vmatmul.mubr.f32.gmra.mrb[0].mxu0 %v263
        %v962 = vpop.f32.mrb[0].mxu0
        %v963 = vadd.f32 %v426, %v962
        %v964 = vpop.f32.mrb[0].mxu0
        %v965 = vadd.f32 %v426, %v964
        %966 = vmatprep.mubr.f32.mxu0 0.0
        %967 = vmatmul.mubr.f32.gmra.mrb[0].mxu0 %v264
        %v968 = vpop.f32.mrb[0].mxu0
        %v969 = vadd.f32 %v431, %v968
        %v970 = vpop.f32.mrb[0].mxu0
        %v971 = vadd.f32 %v431, %v970
        %972 = vmatprep.mubr.f32.mxu0 0.0
        %973 = vmatmul.mubr.f32.gmra.mrb[0].mxu0 %v265
        %v974 = vpop.f32.mrb[0].mxu0
        %v975 = vadd.f32 %v436, %v974
        %v976 = vpop.f32.mrb[0].mxu0
        %v977 = vadd.f32 %v436, %v976
        %978 = vmatprep.mubr.f32.mxu0 0.0
        %979 = vmatmul.mubr.f32.gmra.mrb[0].mxu0 %v266
        %v980 = vpop.f32.mrb[0].mxu0
        %v981 = vadd.f32 %v441, %v980
        %v982 = vpop.f32.mrb[0].mxu0
        %v983 = vadd.f32 %v441, %v982
        %984 = vmatprep.mubr.f32.mxu0 0.0
        %985 = vmatmul.mubr.f32.gmra.mrb[0].mxu0 %v267
        %v986 = vpop.f32.mrb[0].mxu0
        %v987 = vadd.f32 %v446, %v986
        %v988 = vpop.f32.mrb[0].mxu0
        %v989 = vadd.f32 %v446, %v988
        %990 = vmatprep.mubr.f32.mxu0 0.0
        %991 = vmatmul.mubr.f32.gmra.mrb[0].mxu0 %v268
        %v992 = vpop.f32.mrb[0].mxu0
        %v993 = vadd.f32 %v451, %v992
        %v994 = vpop.f32.mrb[0].mxu0
        %v995 = vadd.f32 %v451, %v994
        %996 = vmatprep.mubr.f32.mxu0 0.0
        %997 = vmatmul.mubr.f32.gmra.mrb[0].mxu0 %v269
        %v998 = vpop.f32.mrb[0].mxu0
        %v999 = vadd.f32 %v456, %v998
        %v1000 = vpop.f32.mrb[0].mxu0
        %v1001 = vadd.f32 %v456, %v1000
        %1002 = vmatprep.mubr.f32.mxu0 0.0
        %1003 = vmatmul.mubr.f32.gmra.mrb[0].mxu0 %v270
        %v1004 = vpop.f32.mrb[0].mxu0
        %v1005 = vadd.f32 %v461, %v1004
        %v1006 = vpop.f32.mrb[0].mxu0
        %v1007 = vadd.f32 %v461, %v1006
        %1008 = vmatprep.mubr.f32.mxu0 0.0
        %1009 = vmatmul.mubr.f32.gmra.mrb[0].mxu0 %v271
        %v1010 = vpop.f32.mrb[0].mxu0
        %v1011 = vadd.f32 %v466, %v1010
        %v1012 = vpop.f32.mrb[0].mxu0
        %v1013 = vadd.f32 %v466, %v1012
        %1014 = vmatprep.mubr.f32.mxu0 0.0
        %1015 = vmatmul.mubr.f32.gmra.mrb[0].mxu0 %v272
        %v1016 = vpop.f32.mrb[0].mxu0
        %v1017 = vadd.f32 %v471, %v1016
        %v1018 = vpop.f32.mrb[0].mxu0
        %v1019 = vadd.f32 %v471, %v1018
        %1020 = vdwg.mxu0
        %v1021 = vpack.c.bf16 %v546, %v540
        %v1022 = vpack.c.bf16 %v548, %v542
        %v1023 = vpack.c.bf16 %v683, %v677
        %v1024 = vpack.c.bf16 %v685, %v679
        %v1025 = vpack.c.bf16 %v820, %v814
        %v1026 = vpack.c.bf16 %v822, %v816
        %v1027 = vpack.c.bf16 %v957, %v951
        %v1028 = vpack.c.bf16 %v959, %v953
        %v1037 = vunpack.c.l.b16 %v1021
        %v1038 = vunpack.c.l.b16 %v1022
        %v1039 = vunpack.c.l.b16 %v1023
        %v1040 = vunpack.c.l.b16 %v1024
        %v1041 = vunpack.c.l.b16 %v1025
        %v1042 = vunpack.c.l.b16 %v1026
        %v1043 = vunpack.c.l.b16 %v1027
        %v1044 = vunpack.c.l.b16 %v1028
        %v1045 = vunpack.c.h.b16 %v1021
        %v1046 = vunpack.c.h.b16 %v1022
        %v1047 = vunpack.c.h.b16 %v1023
        %v1048 = vunpack.c.h.b16 %v1024
        %v1049 = vunpack.c.h.b16 %v1025
        %v1050 = vunpack.c.h.b16 %v1026
        %v1051 = vunpack.c.h.b16 %v1027
        %v1052 = vunpack.c.h.b16 %v1028
        %v1053 = vpack.c.b16 %v1038, %v1037
        %v1054 = vpack.c.b16 %v1040, %v1039
        %v1055 = vpack.c.b16 %v1042, %v1041
        %v1056 = vpack.c.b16 %v1044, %v1043
        %v1057 = vpack.c.b16 %v1046, %v1045
        %v1058 = vpack.c.b16 %v1048, %v1047
        %v1059 = vpack.c.b16 %v1050, %v1049
        %v1060 = vpack.c.b16 %v1052, %v1051
        %1069 = vst [vmem:[%s246] sm:$0xff] %v1053
        %1070 = vst [vmem:[%s246 + $0x8] sm:$0xff] %v1054
        %1071 = vst [vmem:[%s246 + $0x10] sm:$0xff] %v1055
        %1072 = vst [vmem:[%s246 + $0x18] sm:$0xff] %v1056
        %1073 = vst [vmem:[%s246 + $0x20] sm:$0xff] %v1057
        %1074 = vst [vmem:[%s246 + $0x28] sm:$0xff] %v1058
        %1075 = vst [vmem:[%s246 + $0x30] sm:$0xff] %v1059
        %1076 = vst [vmem:[%s246 + $0x38] sm:$0xff] %v1060
        %v1077 = vpack.c.bf16 %v558, %v552
        %v1078 = vpack.c.bf16 %v560, %v554
        %v1079 = vpack.c.bf16 %v695, %v689
        %v1080 = vpack.c.bf16 %v697, %v691
        %v1081 = vpack.c.bf16 %v832, %v826
        %v1082 = vpack.c.bf16 %v834, %v828
        %v1083 = vpack.c.bf16 %v969, %v963
        %v1084 = vpack.c.bf16 %v971, %v965
        %v1093 = vunpack.c.l.b16 %v1077
        %v1094 = vunpack.c.l.b16 %v1078
        %v1095 = vunpack.c.l.b16 %v1079
        %v1096 = vunpack.c.l.b16 %v1080
        %v1097 = vunpack.c.l.b16 %v1081
        %v1098 = vunpack.c.l.b16 %v1082
        %v1099 = vunpack.c.l.b16 %v1083
        %v1100 = vunpack.c.l.b16 %v1084
        %v1101 = vunpack.c.h.b16 %v1077
        %v1102 = vunpack.c.h.b16 %v1078
        %v1103 = vunpack.c.h.b16 %v1079
        %v1104 = vunpack.c.h.b16 %v1080
        %v1105 = vunpack.c.h.b16 %v1081
        %v1106 = vunpack.c.h.b16 %v1082
        %v1107 = vunpack.c.h.b16 %v1083
        %v1108 = vunpack.c.h.b16 %v1084
        %v1109 = vpack.c.b16 %v1094, %v1093
        %v1110 = vpack.c.b16 %v1096, %v1095
        %v1111 = vpack.c.b16 %v1098, %v1097
        %v1112 = vpack.c.b16 %v1100, %v1099
        %v1113 = vpack.c.b16 %v1102, %v1101
        %v1114 = vpack.c.b16 %v1104, %v1103
        %v1115 = vpack.c.b16 %v1106, %v1105
        %v1116 = vpack.c.b16 %v1108, %v1107
        %1125 = vst [vmem:[%s253] sm:$0xff] %v1109
        %1126 = vst [vmem:[%s253 + $0x8] sm:$0xff] %v1110
        %1127 = vst [vmem:[%s253 + $0x10] sm:$0xff] %v1111
        %1128 = vst [vmem:[%s253 + $0x18] sm:$0xff] %v1112
        %1129 = vst [vmem:[%s253 + $0x20] sm:$0xff] %v1113
        %1130 = vst [vmem:[%s253 + $0x28] sm:$0xff] %v1114
        %1131 = vst [vmem:[%s253 + $0x30] sm:$0xff] %v1115
        %1132 = vst [vmem:[%s253 + $0x38] sm:$0xff] %v1116
        %v1133 = vpack.c.bf16 %v570, %v564
        %v1134 = vpack.c.bf16 %v572, %v566
        %v1135 = vpack.c.bf16 %v707, %v701
        %v1136 = vpack.c.bf16 %v709, %v703
        %v1137 = vpack.c.bf16 %v844, %v838
        %v1138 = vpack.c.bf16 %v846, %v840
        %v1139 = vpack.c.bf16 %v981, %v975
        %v1140 = vpack.c.bf16 %v983, %v977
        %v1141 = vpack.c.bf16 %v582, %v576
        %v1142 = vpack.c.bf16 %v584, %v578
        %v1143 = vpack.c.bf16 %v719, %v713
        %v1144 = vpack.c.bf16 %v721, %v715
        %v1145 = vpack.c.bf16 %v856, %v850
        %v1146 = vpack.c.bf16 %v858, %v852
        %v1147 = vpack.c.bf16 %v993, %v987
        %v1148 = vpack.c.bf16 %v995, %v989
        %v1149 = vpack.c.bf16 %v594, %v588
        %v1150 = vpack.c.bf16 %v596, %v590
        %v1151 = vpack.c.bf16 %v731, %v725
        %v1152 = vpack.c.bf16 %v733, %v727
        %v1153 = vpack.c.bf16 %v868, %v862
        %v1154 = vpack.c.bf16 %v870, %v864
        %v1155 = vpack.c.bf16 %v1005, %v999
        %v1156 = vpack.c.bf16 %v1007, %v1001
        %v1157 = vpack.c.bf16 %v606, %v600
        %v1158 = vpack.c.bf16 %v608, %v602
        %v1159 = vpack.c.bf16 %v743, %v737
        %v1160 = vpack.c.bf16 %v745, %v739
        %v1161 = vpack.c.bf16 %v880, %v874
        %v1162 = vpack.c.bf16 %v882, %v876
        %v1163 = vpack.c.bf16 %v1017, %v1011
        %v1164 = vpack.c.bf16 %v1019, %v1013
        %v1197 = vunpack.c.l.b16 %v1133
        %v1198 = vunpack.c.l.b16 %v1134
        %v1199 = vunpack.c.l.b16 %v1135
        %v1200 = vunpack.c.l.b16 %v1136
        %v1201 = vunpack.c.l.b16 %v1137
        %v1202 = vunpack.c.l.b16 %v1138
        %v1203 = vunpack.c.l.b16 %v1139
        %v1204 = vunpack.c.l.b16 %v1140
        %v1205 = vunpack.c.h.b16 %v1133
        %v1206 = vunpack.c.h.b16 %v1134
        %v1207 = vunpack.c.h.b16 %v1135
        %v1208 = vunpack.c.h.b16 %v1136
        %v1209 = vunpack.c.h.b16 %v1137
        %v1210 = vunpack.c.h.b16 %v1138
        %v1211 = vunpack.c.h.b16 %v1139
        %v1212 = vunpack.c.h.b16 %v1140
        %v1213 = vunpack.c.l.b16 %v1141
        %v1214 = vunpack.c.l.b16 %v1142
        %v1215 = vunpack.c.l.b16 %v1143
        %v1216 = vunpack.c.l.b16 %v1144
        %v1217 = vunpack.c.l.b16 %v1145
        %v1218 = vunpack.c.l.b16 %v1146
        %v1219 = vunpack.c.l.b16 %v1147
        %v1220 = vunpack.c.l.b16 %v1148
        %v1221 = vunpack.c.h.b16 %v1141
        %v1222 = vunpack.c.h.b16 %v1142
        %v1223 = vunpack.c.h.b16 %v1143
        %v1224 = vunpack.c.h.b16 %v1144
        %v1225 = vunpack.c.h.b16 %v1145
        %v1226 = vunpack.c.h.b16 %v1146
        %v1227 = vunpack.c.h.b16 %v1147
        %v1228 = vunpack.c.h.b16 %v1148
        %v1229 = vunpack.c.l.b16 %v1149
        %v1230 = vunpack.c.l.b16 %v1150
        %v1231 = vunpack.c.l.b16 %v1151
        %v1232 = vunpack.c.l.b16 %v1152
        %v1233 = vunpack.c.l.b16 %v1153
        %v1234 = vunpack.c.l.b16 %v1154
        %v1235 = vunpack.c.l.b16 %v1155
        %v1236 = vunpack.c.l.b16 %v1156
        %v1237 = vunpack.c.h.b16 %v1149
        %v1238 = vunpack.c.h.b16 %v1150
        %v1239 = vunpack.c.h.b16 %v1151
        %v1240 = vunpack.c.h.b16 %v1152
        %v1241 = vunpack.c.h.b16 %v1153
        %v1242 = vunpack.c.h.b16 %v1154
        %v1243 = vunpack.c.h.b16 %v1155
        %v1244 = vunpack.c.h.b16 %v1156
        %v1245 = vunpack.c.l.b16 %v1157
        %v1246 = vunpack.c.l.b16 %v1158
        %v1247 = vunpack.c.l.b16 %v1159
        %v1248 = vunpack.c.l.b16 %v1160
        %v1249 = vunpack.c.l.b16 %v1161
        %v1250 = vunpack.c.l.b16 %v1162
        %v1251 = vunpack.c.l.b16 %v1163
        %v1252 = vunpack.c.l.b16 %v1164
        %v1253 = vunpack.c.h.b16 %v1157
        %v1254 = vunpack.c.h.b16 %v1158
        %v1255 = vunpack.c.h.b16 %v1159
        %v1256 = vunpack.c.h.b16 %v1160
        %v1257 = vunpack.c.h.b16 %v1161
        %v1258 = vunpack.c.h.b16 %v1162
        %v1259 = vunpack.c.h.b16 %v1163
        %v1260 = vunpack.c.h.b16 %v1164
        %v1261 = vpack.c.b16 %v1198, %v1197
        %v1262 = vpack.c.b16 %v1200, %v1199
        %v1263 = vpack.c.b16 %v1202, %v1201
        %v1264 = vpack.c.b16 %v1204, %v1203
        %v1265 = vpack.c.b16 %v1206, %v1205
        %v1266 = vpack.c.b16 %v1208, %v1207
        %v1267 = vpack.c.b16 %v1210, %v1209
        %v1268 = vpack.c.b16 %v1212, %v1211
        %v1269 = vpack.c.b16 %v1214, %v1213
        %v1270 = vpack.c.b16 %v1216, %v1215
        %v1271 = vpack.c.b16 %v1218, %v1217
        %v1272 = vpack.c.b16 %v1220, %v1219
        %v1273 = vpack.c.b16 %v1222, %v1221
        %v1274 = vpack.c.b16 %v1224, %v1223
        %v1275 = vpack.c.b16 %v1226, %v1225
        %v1276 = vpack.c.b16 %v1228, %v1227
        %v1277 = vpack.c.b16 %v1230, %v1229
        %v1278 = vpack.c.b16 %v1232, %v1231
        %v1279 = vpack.c.b16 %v1234, %v1233
        %v1280 = vpack.c.b16 %v1236, %v1235
        %v1281 = vpack.c.b16 %v1238, %v1237
        %v1282 = vpack.c.b16 %v1240, %v1239
        %v1283 = vpack.c.b16 %v1242, %v1241
        %v1284 = vpack.c.b16 %v1244, %v1243
        %v1285 = vpack.c.b16 %v1246, %v1245
        %v1286 = vpack.c.b16 %v1248, %v1247
        %v1287 = vpack.c.b16 %v1250, %v1249
        %v1288 = vpack.c.b16 %v1252, %v1251
        %v1289 = vpack.c.b16 %v1254, %v1253
        %v1290 = vpack.c.b16 %v1256, %v1255
        %v1291 = vpack.c.b16 %v1258, %v1257
        %v1292 = vpack.c.b16 %v1260, %v1259
        %1325 = vst [vmem:[%s260] sm:$0xff] %v1261
        %1326 = vst [vmem:[%s260 + $0x8] sm:$0xff] %v1262
        %1327 = vst [vmem:[%s260 + $0x10] sm:$0xff] %v1263
        %1328 = vst [vmem:[%s260 + $0x18] sm:$0xff] %v1264
        %1329 = vst [vmem:[%s260 + $0x20] sm:$0xff] %v1265
        %1330 = vst [vmem:[%s260 + $0x28] sm:$0xff] %v1266
        %1331 = vst [vmem:[%s260 + $0x30] sm:$0xff] %v1267
        %1332 = vst [vmem:[%s260 + $0x38] sm:$0xff] %v1268
        %1333 = vst [vmem:[%s260 + $0x40] sm:$0xff] %v1269
        %1334 = vst [vmem:[%s260 + $0x48] sm:$0xff] %v1270
        %1335 = vst [vmem:[%s260 + $0x50] sm:$0xff] %v1271
        %1336 = vst [vmem:[%s260 + $0x58] sm:$0xff] %v1272
        %1337 = vst [vmem:[%s260 + $0x60] sm:$0xff] %v1273
        %1338 = vst [vmem:[%s260 + $0x68] sm:$0xff] %v1274
        %1339 = vst [vmem:[%s260 + $0x70] sm:$0xff] %v1275
        %1340 = vst [vmem:[%s260 + $0x78] sm:$0xff] %v1276
        %1341 = vst [vmem:[%s260 + $0x80] sm:$0xff] %v1277
        %1342 = vst [vmem:[%s260 + $0x88] sm:$0xff] %v1278
        %1343 = vst [vmem:[%s260 + $0x90] sm:$0xff] %v1279
        %1344 = vst [vmem:[%s260 + $0x98] sm:$0xff] %v1280
        %1345 = vst [vmem:[%s260 + $0xa0] sm:$0xff] %v1281
        %1346 = vst [vmem:[%s260 + $0xa8] sm:$0xff] %v1282
        %1347 = vst [vmem:[%s260 + $0xb0] sm:$0xff] %v1283
        %1348 = vst [vmem:[%s260 + $0xb8] sm:$0xff] %v1284
        %1349 = vst [vmem:[%s260 + $0xc0] sm:$0xff] %v1285
        %1350 = vst [vmem:[%s260 + $0xc8] sm:$0xff] %v1286
        %1351 = vst [vmem:[%s260 + $0xd0] sm:$0xff] %v1287
        %1352 = vst [vmem:[%s260 + $0xd8] sm:$0xff] %v1288
        %1353 = vst [vmem:[%s260 + $0xe0] sm:$0xff] %v1289
        %1354 = vst [vmem:[%s260 + $0xe8] sm:$0xff] %v1290
        %1355 = vst [vmem:[%s260 + $0xf0] sm:$0xff] %v1291
        %1356 = vst [vmem:[%s260 + $0xf8] sm:$0xff] %v1292
        %s1357 = sand.u32 %s102, 1
        %s1358 = scalar_lea.sflag [#allocation4], %s1357
        %s1359 = sand.u32 %s102, 1
        %s1360 = smul.addr %s1359, 64
        %s1361 = scalar_lea.vmem [#allocation5], %s1360
        %s1362 = sand.u32 %s26, 1
        %s1363 = scalar_lea.sflag [#allocation7], %s1362
        %s1364 = sand.u32 %s128, 1
        %s1365 = smul.addr %s1364, 64
        %s1366 = scalar_lea.vmem [#allocation6], %s1365
        %s1367 = sand.u32 %s26, 1
        %s1368 = scalar_lea.sflag [#allocation7], %s1367
        %s1369 = sand.u32 %s154, 1
        %s1370 = smul.addr %s1369, 256
        %s1371 = scalar_lea.vmem [#allocation8], %s1370
        // Predicated region
        $region37: #{tpu_custom_call.1} parent=31 // pred_check
          %p1372 = pneg %p112
        $region38: #{tpu_custom_call.1} parent=31 // pred_check_branch
          %1374 = sbr.rel (%p1372) target = $region40
        $region39: #{tpu_custom_call.1} parent=31 // pred_region
          %s1376 = ssub.s32 1024, 1024
          %1377 = vsyncadd %s1358, %s1376
          %s1378 = smul.addr %s26, 16
          %s1379 = smul.addr %s1378, 64
          %s1380 = scalar_lea.hbm %s3, %s1379
          %s1381 = sshll.u32 %s1361, 4
          %s1382 = int_to_ptr.vmem [resolvable:$true] %s1381
          %1387 = dma.vmem_to_hbm [thread:$0]  %s1382, 1024, %s1380, %s1358, 512, 512, 32
        $region40: #{tpu_custom_call.1} parent=31 // pred_fallthru
          _
        // Predicated region
        $region41: #{tpu_custom_call.1} parent=31 // pred_check
          %p1388 = pneg %p138
        $region42: #{tpu_custom_call.1} parent=31 // pred_check_branch
          %1390 = sbr.rel (%p1388) target = $region44
        $region43: #{tpu_custom_call.1} parent=31 // pred_region
          %s1392 = ssub.s32 1024, 1024
          %1393 = vsyncadd %s1363, %s1392
          %s1394 = smul.addr %s26, 16
          %s1395 = smul.addr %s1394, 64
          %s1396 = scalar_lea.hbm %s4, %s1395
          %s1397 = sshll.u32 %s1366, 4
          %s1398 = int_to_ptr.vmem [resolvable:$true] %s1397
          %1403 = dma.vmem_to_hbm [thread:$0]  %s1398, 1024, %s1396, %s1363, 512, 512, 32
        $region44: #{tpu_custom_call.1} parent=31 // pred_fallthru
          _
        // Predicated region
        $region45: #{tpu_custom_call.1} parent=31 // pred_check
          %p1404 = pneg %p164
        $region46: #{tpu_custom_call.1} parent=31 // pred_check_branch
          %1406 = sbr.rel (%p1404) target = $region48
        $region47: #{tpu_custom_call.1} parent=31 // pred_region
          %s1408 = ssub.s32 4096, 4096
          %1409 = vsyncadd %s1368, %s1408
          %s1410 = smul.addr %s26, 64
          %s1411 = smul.addr %s1410, 64
          %s1412 = scalar_lea.hbm %s5, %s1411
          %s1413 = sshll.u32 %s1371, 4
          %s1414 = int_to_ptr.vmem [resolvable:$true] %s1413
          %1419 = dma.vmem_to_hbm [thread:$0]  %s1414, 4096, %s1412, %s1368, 512, 512, 32
        $region48: #{tpu_custom_call.1} parent=31 // pred_fallthru
          _
      $region32: #{tpu_custom_call.1} parent=5 // pred_fallthru
        _
      %p1420 = scmp.le.s32.totalorder 2, %s21
      // Predicated region
      $region49: #{tpu_custom_call.1} parent=5 // pred_check
        %p1421 = pneg %p1420
      $region50: #{tpu_custom_call.1} parent=5 // pred_check_branch
        %1423 = sbr.rel (%p1421) target = $region52
      $region51: #{tpu_custom_call.1} parent=5 // pred_region
        %s1424 = ssub.s32 %s21, 2
        // Predicated region
        $region53: #{tpu_custom_call.1} parent=51 // pred_check
          %p1425 = pneg %p118
        $region54: #{tpu_custom_call.1} parent=51 // pred_check_branch
          %1427 = sbr.rel (%p1425) target = $region56
        $region55: #{tpu_custom_call.1} parent=51 // pred_region
          %s1428 = sand.u32 %s103, 1
          %s1429 = scalar_lea.sflag [#allocation4], %s1428
          %s1430 = sand.u32 %s103, 1
          %s1431 = smul.addr %s1430, 64
          %s1432 = scalar_lea.vmem [#allocation5], %s1431
          %1433 = dma.done %s1429, 1024
        $region56: #{tpu_custom_call.1} parent=51 // pred_fallthru
          _
        // Predicated region
        $region57: #{tpu_custom_call.1} parent=51 // pred_check
          %p1434 = pneg %p144
        $region58: #{tpu_custom_call.1} parent=51 // pred_check_branch
          %1436 = sbr.rel (%p1434) target = $region60
        $region59: #{tpu_custom_call.1} parent=51 // pred_region
          %s1437 = sand.u32 %s27, 1
          %s1438 = scalar_lea.sflag [#allocation7], %s1437
          %s1439 = sand.u32 %s129, 1
          %s1440 = smul.addr %s1439, 64
          %s1441 = scalar_lea.vmem [#allocation6], %s1440
          %1442 = dma.done %s1438, 1024
        $region60: #{tpu_custom_call.1} parent=51 // pred_fallthru
          _
        // Predicated region
        $region61: #{tpu_custom_call.1} parent=51 // pred_check
          %p1443 = pneg %p170
        $region62: #{tpu_custom_call.1} parent=51 // pred_check_branch
          %1445 = sbr.rel (%p1443) target = $region64
        $region63: #{tpu_custom_call.1} parent=51 // pred_region
          %s1446 = sand.u32 %s27, 1
          %s1447 = scalar_lea.sflag [#allocation7], %s1446
          %s1448 = sand.u32 %s155, 1
          %s1449 = smul.addr %s1448, 256
          %s1450 = scalar_lea.vmem [#allocation8], %s1449
          %1451 = dma.done %s1447, 4096
        $region64: #{tpu_custom_call.1} parent=51 // pred_fallthru
          _
      $region52: #{tpu_custom_call.1} parent=5 // pred_fallthru
        _
    $region6: #{tpu_custom_call.1} parent=1 // loop_footer
      %s25 = sadd.s32 1, %s21
    $region7: #{tpu_custom_call.1} parent=1 // loop_footer_branch
      %20 = sbr.rel target = $region3
    $region8: #{tpu_custom_call.1} parent=1 // loop_exit
      _
    %1452 = vsyncpa [#allocation3], 1
    %s1453 = scalar_lea.sflag [#allocation3], 1
    %1454 = vsyncpa %s1453, 1
    %1455 = vsyncpa [#allocation4], 1
    %s1456 = scalar_lea.sflag [#allocation4], 1
    %1457 = vsyncpa %s1456, 1
    %1458 = vsyncpa [#allocation7], 1
    %s1459 = scalar_lea.sflag [#allocation7], 1
    %1460 = vsyncpa %s1459, 1

</llo_original>
